<compile_context>
chip_gen: v5e
topology: v5e:2x2
jax: 0.10.0
libtpu: 0.0.40
codegen_flags: <defaults>
</compile_context>

<pallas_src>
import functools
import math

import jax
import jax.numpy as jnp
import numpy as np
from jax.experimental import pallas as pl
from jax.experimental.pallas import tpu as pltpu


def _elu(x):
    return jnp.where(x > 0, x, jnp.exp(x) - 1.0)


def _round_up(x, m):
    return ((x + m - 1) // m) * m


# ----------------------------------------------------------------------------
# Fused DGSR kernel: linear + gather + time-enc + orgat + att + agg + residual
# ----------------------------------------------------------------------------
def dgsr_fused_kernel(dst_ref, idx_ref, mask_ref, time_ref,
                      src_ref, w_dst_ref, w_src_ref, emb_ref, agg_ref,
                      o_ref, *, hidden, hp):
    dst_raw = dst_ref[...]          # [B, Hp]  raw dst features (also residual)
    idx = idx_ref[...]              # [B, L]   neighbor row ids into src table
    mask = mask_ref[...]            # [B, L]   1.0 = real edge, 0.0 = padding
    t = time_ref[...]               # [B, L]   edge times
    src_raw = src_ref[...]          # [Ns, Hp] raw source node features
    w_dst = w_dst_ref[...]          # [Hp, Hp] pre-transposed dst Linear
    w_src = w_src_ref[...]          # [Hp, Hp] pre-transposed src Linear
    emb = emb_ref[...]              # [Lmax, 2Hp] concat(time_enc_q | time_enc_k)
    agg = agg_ref[...]              # [2Hp, Hp] pre-transposed, fused agg_gate

    B, L = t.shape
    Ns = src_raw.shape[0]
    Lmax = emb.shape[0]
    scale = jnp.float32(1.0 / math.sqrt(float(hidden)))
    neg = jnp.float32(-1e30)

    # Node linears (feat_drop = identity in eval mode).  No in-kernel .T.
    dst_h = jnp.dot(dst_raw, w_dst, preferred_element_type=jnp.float32)   # [B, Hp]
    src_h = jnp.dot(src_raw, w_src, preferred_element_type=jnp.float32)   # [Ns, Hp]

    # Neighbor gather fused in-kernel via one-hot matmul (MXU); no HBM mailbox.
    g_iota = jax.lax.broadcasted_iota(jnp.int32, (B, L, Ns), 2)
    g_onehot = (g_iota == idx[:, :, None]).astype(jnp.float32).reshape(B * L, Ns)
    mail = jnp.dot(g_onehot, src_h, preferred_element_type=jnp.float32)   # [B*L, Hp]
    mail3 = mail.reshape(B, L, hp)                                        # [B, L, Hp]

    # re_order = L - argsort(argsort(time)) - 1  (pairwise rank; distinct times)
    rank_asc = jnp.sum((t[:, None, :] < t[:, :, None]).astype(jnp.int32), axis=-1)
    re_order = (L - 1) - rank_asc                                         # [B, L]

    # Fused time-encoding lookup (q and k tables in one [Lmax, 2Hp] matmul).
    p_iota = jax.lax.broadcasted_iota(jnp.int32, (B, L, Lmax), 2)
    p_onehot = (p_iota == re_order[:, :, None]).astype(jnp.float32).reshape(B * L, Lmax)
    te_cat = jnp.dot(p_onehot, emb, preferred_element_type=jnp.float32)   # [B*L, 2Hp]
    te = te_cat[:, :hp].reshape(B, L, hp)
    te_k = te_cat[:, hp:].reshape(B, L, hp)

    # ---- long-term ('orgat') attention ----
    e = jnp.sum((te + mail3) * dst_h[:, None, :], axis=2) * scale         # [B, L]
    e = jnp.where(mask > 0, e, neg)
    e = e - jnp.max(e, axis=1, keepdims=True)
    p = jnp.exp(e)
    alpha = p * pl.reciprocal(jnp.sum(p, axis=1, keepdims=True), approx=True)
    h_long = jnp.sum(alpha[:, :, None] * (mail3 + te_k), axis=1)          # [B, Hp]

    # ---- short-term ('att') attention anchored at latest (max-time) edge ----
    lane = jax.lax.broadcasted_iota(jnp.int32, (B, L), 1)
    t_eff = jnp.where(mask > 0, t, neg)
    is_max = t_eff == jnp.max(t_eff, axis=1, keepdims=True)
    first_idx = jnp.min(jnp.where(is_max, lane, L), axis=1, keepdims=True)
    last_onehot = (lane == first_idx).astype(jnp.float32)                 # [B, L]
    last_em = jnp.sum(last_onehot[:, :, None] * mail3, axis=1)            # [B, Hp]

    e1 = jnp.sum(last_em[:, None, :] * mail3, axis=2) * scale             # [B, L]
    e1 = jnp.where(mask > 0, e1, neg)
    e1 = e1 - jnp.max(e1, axis=1, keepdims=True)
    p1 = jnp.exp(e1)
    alpha1 = p1 * pl.reciprocal(jnp.sum(p1, axis=1, keepdims=True), approx=True)
    h_short = jnp.sum(alpha1[:, :, None] * mail3, axis=1)                 # [B, Hp]

    # ---- agg_gate: single fused matmul cat([h_long, h_short]) @ W_t ----
    h_cat = jnp.concatenate([h_long, h_short], axis=-1)                   # [B, 2Hp]
    h_new = jnp.dot(h_cat, agg, preferred_element_type=jnp.float32)       # [B, Hp]

    # ---- residual update: elu(new + old) ----
    o_ref[...] = _elu(h_new + dst_raw)


# ----------------------------------------------------------------------------
# Wrapper: padding to lane-dense tiles, weight pre-transpose, pallas_call.
# ----------------------------------------------------------------------------
def dgsr_side(dst_feat, src_feat, nbr_idx, nbr_time, nbr_mask,
              w_dst, w_src, emb_q, emb_k, agg_w, *, block_rows=256):
    N, H = dst_feat.shape
    Ns = src_feat.shape[0]
    L = nbr_idx.shape[1]
    Lmax = emb_q.shape[0]
    Hp = _round_up(max(H, 128), 128)

    blk = block_rows if N >= block_rows else _round_up(N, 8)
    Np = _round_up(N, blk)
    Nsp = _round_up(Ns, 8)

    f32 = jnp.float32
    dst_p = jnp.zeros((Np, Hp), f32).at[:N, :H].set(dst_feat)
    src_p = jnp.zeros((Nsp, Hp), f32).at[:Ns, :H].set(src_feat)
    idx_p = jnp.zeros((Np, L), jnp.int32).at[:N].set(nbr_idx.astype(jnp.int32))
    time_p = jnp.zeros((Np, L), f32).at[:N].set(nbr_time)
    mask_p = jnp.zeros((Np, L), f32).at[:N].set(nbr_mask)

    # nn.Linear weights are [out, in]; pre-transpose so kernel does x @ w.
    w_dst_t = jnp.zeros((Hp, Hp), f32).at[:H, :H].set(w_dst.T)
    w_src_t = jnp.zeros((Hp, Hp), f32).at[:H, :H].set(w_src.T)
    emb_cat = (jnp.zeros((Lmax, 2 * Hp), f32)
               .at[:, :H].set(emb_q)
               .at[:, Hp:Hp + H].set(emb_k))
    agg_t = (jnp.zeros((2 * Hp, Hp), f32)
             .at[:H, :H].set(agg_w[:, :H].T)
             .at[Hp:Hp + H, :H].set(agg_w[:, H:].T))

    kern = functools.partial(dgsr_fused_kernel, hidden=H, hp=Hp)
    out_p = pl.pallas_call(
        kern,
        out_shape=jax.ShapeDtypeStruct((Np, Hp), jnp.float32),
        grid=(Np // blk,),
        in_specs=[
            pl.BlockSpec((blk, Hp), lambda i: (i, 0)),        # dst raw
            pl.BlockSpec((blk, L), lambda i: (i, 0)),         # neighbor ids
            pl.BlockSpec((blk, L), lambda i: (i, 0)),         # edge mask
            pl.BlockSpec((blk, L), lambda i: (i, 0)),         # edge times
            pl.BlockSpec((Nsp, Hp), lambda i: (0, 0)),        # src table (resident)
            pl.BlockSpec((Hp, Hp), lambda i: (0, 0)),         # w_dst (pre-T)
            pl.BlockSpec((Hp, Hp), lambda i: (0, 0)),         # w_src (pre-T)
            pl.BlockSpec((Lmax, 2 * Hp), lambda i: (0, 0)),   # time enc (q|k)
            pl.BlockSpec((2 * Hp, Hp), lambda i: (0, 0)),     # agg_gate (pre-T)
        ],
        out_specs=pl.BlockSpec((blk, Hp), lambda i: (i, 0)),
        compiler_params=pltpu.CompilerParams(
            dimension_semantics=("parallel",)),
    )(dst_p, idx_p, mask_p, time_p, src_p, w_dst_t, w_src_t, emb_cat, agg_t)
    return out_p[:N, :H]


def dgsr_forward(params, user_feat, item_feat,
                 user_nbr_items, user_nbr_time, user_nbr_mask,
                 item_nbr_users, item_nbr_time, item_nbr_mask):
    # 'by'  edges: item -> user  (user_reduce_func)
    new_user = dgsr_side(user_feat, item_feat, user_nbr_items, user_nbr_time,
                         user_nbr_mask,
                         params["user_weight"], params["item_weight"],
                         params["u_time_encoding"], params["u_time_encoding_k"],
                         params["agg_gate_u"])
    # 'pby' edges: user -> item  (item_reduce_func)
    new_item = dgsr_side(item_feat, user_feat, item_nbr_users, item_nbr_time,
                         item_nbr_mask,
                         params["item_weight"], params["user_weight"],
                         params["i_time_encoding"], params["i_time_encoding_k"],
                         params["agg_gate_i"])
    return {"user": new_user, "item": new_item}


# ----------------------------------------------------------------------------
# Pure-JAX reference (mirrors the PyTorch reduce functions) for validation.
# ----------------------------------------------------------------------------
def dgsr_side_ref(dst_feat, src_feat, nbr_idx, nbr_time, nbr_mask,
                  w_dst, w_src, emb_q, emb_k, agg_w):
    H = dst_feat.shape[1]
    L = nbr_idx.shape[1]
    dst_h = dst_feat @ w_dst.T
    src_h = src_feat @ w_src.T
    mail = src_h[nbr_idx]                                   # [N, L, H]
    order = jnp.argsort(jnp.argsort(nbr_time, axis=1), axis=1)
    re_order = L - order - 1
    te, te_k = emb_q[re_order], emb_k[re_order]
    scale = 1.0 / jnp.sqrt(jnp.float32(H))
    e = jnp.sum((te + mail) * dst_h[:, None, :], axis=2) * scale
    e = jnp.where(nbr_mask > 0, e, -1e30)
    alpha = jax.nn.softmax(e, axis=1)
    h_long = jnp.sum(alpha[:, :, None] * (mail + te_k), axis=1)
    t_eff = jnp.where(nbr_mask > 0, nbr_time, -1e30)
    last = jnp.argmax(t_eff, axis=1)
    last_em = mail[jnp.arange(mail.shape[0]), last]
    e1 = jnp.sum(last_em[:, None, :] * mail, axis=2) * scale
    e1 = jnp.where(nbr_mask > 0, e1, -1e30)
    alpha1 = jax.nn.softmax(e1, axis=1)
    h_short = jnp.sum(alpha1[:, :, None] * mail, axis=1)
    h_new = jnp.concatenate([h_long, h_short], axis=-1) @ agg_w.T
    z = h_new + dst_feat
    return jnp.where(z > 0, z, jnp.exp(z) - 1.0)


if __name__ == "__main__":
    # Small, module-consistent shapes.
    H = 32                 # hidden_size (in_feats == out_feats)
    Nu, Ni = 16, 24        # number of user / item nodes
    item_max_length = 8    # => user mailbox length Lu
    user_max_length = 8    # => item mailbox length Li
    Lu, Li = item_max_length, user_max_length

    key = jax.random.PRNGKey(0)
    keys = jax.random.split(key, 12)

    params = {
        "user_weight":       0.1 * jax.random.normal(keys[0], (H, H), jnp.float32),
        "item_weight":       0.1 * jax.random.normal(keys[1], (H, H), jnp.float32),
        "agg_gate_u":        0.1 * jax.random.normal(keys[2], (H, 2 * H), jnp.float32),
        "agg_gate_i":        0.1 * jax.random.normal(keys[3], (H, 2 * H), jnp.float32),
        "u_time_encoding":   0.1 * jax.random.normal(keys[4], (item_max_length, H), jnp.float32),
        "u_time_encoding_k": 0.1 * jax.random.normal(keys[5], (item_max_length, H), jnp.float32),
        "i_time_encoding":   0.1 * jax.random.normal(keys[6], (user_max_length, H), jnp.float32),
        "i_time_encoding_k": 0.1 * jax.random.normal(keys[7], (user_max_length, H), jnp.float32),
    }

    user_feat = jax.random.normal(keys[8], (Nu, H), jnp.float32)
    item_feat = jax.random.normal(keys[9], (Ni, H), jnp.float32)

    # Dense graph: neighbor indices + distinct edge times per node + full masks.
    user_nbr_items = jax.random.randint(keys[10], (Nu, Lu), 0, Ni)
    item_nbr_users = jax.random.randint(keys[11], (Ni, Li), 0, Nu)
    user_nbr_time = jax.vmap(
        lambda k: jax.random.permutation(k, jnp.arange(Lu, dtype=jnp.float32))
    )(jax.random.split(jax.random.PRNGKey(1), Nu))
    item_nbr_time = jax.vmap(
        lambda k: jax.random.permutation(k, jnp.arange(Li, dtype=jnp.float32))
    )(jax.random.split(jax.random.PRNGKey(2), Ni))
    user_nbr_mask = jnp.ones((Nu, Lu), jnp.float32)
    item_nbr_mask = jnp.ones((Ni, Li), jnp.float32)

    out = dgsr_forward(params, user_feat, item_feat,
                       user_nbr_items, user_nbr_time, user_nbr_mask,
                       item_nbr_users, item_nbr_time, item_nbr_mask)
    jax.block_until_ready(out)

    assert out["user"].shape == (Nu, H) and out["item"].shape == (Ni, H)
    assert jnp.all(jnp.isfinite(out["user"])) and jnp.all(jnp.isfinite(out["item"]))

    # Validate against the pure-JAX reference of the PyTorch reduce functions.
    ref_user = dgsr_side_ref(user_feat, item_feat, user_nbr_items, user_nbr_time,
                             user_nbr_mask, params["user_weight"],
                             params["item_weight"], params["u_time_encoding"],
                             params["u_time_encoding_k"], params["agg_gate_u"])
    ref_item = dgsr_side_ref(item_feat, user_feat, item_nbr_users, item_nbr_time,
                             item_nbr_mask, params["item_weight"],
                             params["user_weight"], params["i_time_encoding"],
                             params["i_time_encoding_k"], params["agg_gate_i"])
    err_u = float(jnp.max(jnp.abs(out["user"] - ref_user)))
    err_i = float(jnp.max(jnp.abs(out["item"] - ref_item)))
    assert err_u < 1e-2 and err_i < 1e-2, (err_u, err_i)

    print("KERNEL_OK")
</pallas_src>

<mosaic_0001>
module attributes {stable_mosaic.version = 11 : i64} {
  func.func @dgsr_fused_kernel(%arg0: i32, %arg1: memref<16x128xf32, #tpu.memory_space<vmem>>, %arg2: memref<16x8xi32, #tpu.memory_space<vmem>>, %arg3: memref<16x8xf32, #tpu.memory_space<vmem>>, %arg4: memref<16x8xf32, #tpu.memory_space<vmem>>, %arg5: memref<24x128xf32, #tpu.memory_space<vmem>>, %arg6: memref<128x128xf32, #tpu.memory_space<vmem>>, %arg7: memref<128x128xf32, #tpu.memory_space<vmem>>, %arg8: memref<8x256xf32, #tpu.memory_space<vmem>>, %arg9: memref<256x128xf32, #tpu.memory_space<vmem>>, %arg10: memref<16x128xf32, #tpu.memory_space<vmem>>) attributes {dimension_semantics = [#tpu.dimension_semantics<parallel>], iteration_bounds = array<i64: 1>, scalar_prefetch = 0 : i64, scratch_operands = 0 : i64, tpu.core_type = #tpu.core_type<tc>, window_params = [{transform_indices = @transform_0, window_bounds = array<i64: 16, 128>}, {transform_indices = @transform_1, window_bounds = array<i64: 16, 8>}, {transform_indices = @transform_2, window_bounds = array<i64: 16, 8>}, {transform_indices = @transform_3, window_bounds = array<i64: 16, 8>}, {pipeline_mode = #tpu.pipeline_mode<synchronous>, transform_indices = @transform_4, window_bounds = array<i64: 24, 128>}, {pipeline_mode = #tpu.pipeline_mode<synchronous>, transform_indices = @transform_5, window_bounds = array<i64: 128, 128>}, {pipeline_mode = #tpu.pipeline_mode<synchronous>, transform_indices = @transform_6, window_bounds = array<i64: 128, 128>}, {pipeline_mode = #tpu.pipeline_mode<synchronous>, transform_indices = @transform_7, window_bounds = array<i64: 8, 256>}, {pipeline_mode = #tpu.pipeline_mode<synchronous>, transform_indices = @transform_8, window_bounds = array<i64: 256, 128>}, {transform_indices = @transform_9, window_bounds = array<i64: 16, 128>}]} {
    %c0 = arith.constant 0 : index
    %c0_0 = arith.constant 0 : index
    %0 = vector.load %arg1[%c0, %c0_0] : memref<16x128xf32, #tpu.memory_space<vmem>>, vector<16x128xf32>
    %c0_1 = arith.constant 0 : index
    %c0_2 = arith.constant 0 : index
    %1 = vector.load %arg2[%c0_1, %c0_2] : memref<16x8xi32, #tpu.memory_space<vmem>>, vector<16x8xi32>
    %c0_3 = arith.constant 0 : index
    %c0_4 = arith.constant 0 : index
    %2 = vector.load %arg3[%c0_3, %c0_4] : memref<16x8xf32, #tpu.memory_space<vmem>>, vector<16x8xf32>
    %c0_5 = arith.constant 0 : index
    %c0_6 = arith.constant 0 : index
    %3 = vector.load %arg4[%c0_5, %c0_6] : memref<16x8xf32, #tpu.memory_space<vmem>>, vector<16x8xf32>
    %c0_7 = arith.constant 0 : index
    %c0_8 = arith.constant 0 : index
    %4 = vector.load %arg5[%c0_7, %c0_8] : memref<24x128xf32, #tpu.memory_space<vmem>>, vector<24x128xf32>
    %c0_9 = arith.constant 0 : index
    %c0_10 = arith.constant 0 : index
    %5 = vector.load %arg6[%c0_9, %c0_10] : memref<128x128xf32, #tpu.memory_space<vmem>>, vector<128x128xf32>
    %c0_11 = arith.constant 0 : index
    %c0_12 = arith.constant 0 : index
    %6 = vector.load %arg7[%c0_11, %c0_12] : memref<128x128xf32, #tpu.memory_space<vmem>>, vector<128x128xf32>
    %c0_13 = arith.constant 0 : index
    %c0_14 = arith.constant 0 : index
    %7 = vector.load %arg8[%c0_13, %c0_14] : memref<8x256xf32, #tpu.memory_space<vmem>>, vector<8x256xf32>
    %c0_15 = arith.constant 0 : index
    %c0_16 = arith.constant 0 : index
    %8 = vector.load %arg9[%c0_15, %c0_16] : memref<256x128xf32, #tpu.memory_space<vmem>>, vector<256x128xf32>
    %cst = arith.constant dense<0.000000e+00> : vector<16x128xf32>
    %9 = tpu.matmul %0, %5, %cst {dimension_numbers = #tpu.dot_dimension_numbers<[1], [0], [0], [1], [0, 0, 1, 1], [], []>} : vector<16x128xf32>, vector<128x128xf32>, vector<16x128xf32> -> vector<16x128xf32>
    %cst_17 = arith.constant dense<0.000000e+00> : vector<24x128xf32>
    %10 = tpu.matmul %4, %6, %cst_17 {dimension_numbers = #tpu.dot_dimension_numbers<[1], [0], [0], [1], [0, 0, 1, 1], [], []>} : vector<24x128xf32>, vector<128x128xf32>, vector<24x128xf32> -> vector<24x128xf32>
    %11 = tpu.iota {dimensions = array<i32: 2>} : vector<16x8x24xi32>
    %12 = vector.shape_cast %1 : vector<16x8xi32> to vector<16x8x1xi32>
    %13 = vector.broadcast %12 : vector<16x8x1xi32> to vector<16x8x24xi32>
    %14 = arith.cmpi eq, %11, %13 : vector<16x8x24xi32>
    %15 = arith.extui %14 : vector<16x8x24xi1> to vector<16x8x24xi32>
    %16 = arith.sitofp %15 : vector<16x8x24xi32> to vector<16x8x24xf32>
    %17 = vector.shape_cast %16 : vector<16x8x24xf32> to vector<128x24xf32>
    %cst_18 = arith.constant dense<0.000000e+00> : vector<128x128xf32>
    %18 = tpu.matmul %17, %10, %cst_18 {dimension_numbers = #tpu.dot_dimension_numbers<[1], [0], [0], [1], [0, 0, 1, 1], [], []>} : vector<128x24xf32>, vector<24x128xf32>, vector<128x128xf32> -> vector<128x128xf32>
    %19 = vector.shape_cast %18 : vector<128x128xf32> to vector<16x8x128xf32>
    %20 = vector.shape_cast %3 : vector<16x8xf32> to vector<16x1x8xf32>
    %21 = vector.shape_cast %3 : vector<16x8xf32> to vector<16x8x1xf32>
    %22 = vector.broadcast %20 : vector<16x1x8xf32> to vector<16x8x8xf32>
    %23 = vector.broadcast %21 : vector<16x8x1xf32> to vector<16x8x8xf32>
    %24 = arith.cmpf olt, %22, %23 : vector<16x8x8xf32>
    %25 = arith.extui %24 : vector<16x8x8xi1> to vector<16x8x8xi32>
    %cst_19 = arith.constant dense<0> : vector<16x8xi32>
    %26 = vector.multi_reduction <add>, %25, %cst_19 [2] : vector<16x8x8xi32> to vector<16x8xi32>
    %c7_i32 = arith.constant 7 : i32
    %27 = vector.broadcast %c7_i32 : i32 to vector<16x8xi32>
    %28 = arith.subi %27, %26 : vector<16x8xi32>
    %29 = tpu.iota {dimensions = array<i32: 2>} : vector<16x8x8xi32>
    %30 = vector.shape_cast %28 : vector<16x8xi32> to vector<16x8x1xi32>
    %31 = vector.broadcast %30 : vector<16x8x1xi32> to vector<16x8x8xi32>
    %32 = arith.cmpi eq, %29, %31 : vector<16x8x8xi32>
    %33 = arith.extui %32 : vector<16x8x8xi1> to vector<16x8x8xi32>
    %34 = arith.sitofp %33 : vector<16x8x8xi32> to vector<16x8x8xf32>
    %35 = vector.shape_cast %34 : vector<16x8x8xf32> to vector<128x8xf32>
    %cst_20 = arith.constant dense<0.000000e+00> : vector<128x256xf32>
    %36 = tpu.matmul %35, %7, %cst_20 {dimension_numbers = #tpu.dot_dimension_numbers<[1], [0], [0], [1], [0, 0, 1, 1], [], []>} : vector<128x8xf32>, vector<8x256xf32>, vector<128x256xf32> -> vector<128x256xf32>
    %37 = vector.extract_strided_slice %36 {offsets = [0, 0], sizes = [128, 128], strides = [1, 1]} : vector<128x256xf32> to vector<128x128xf32>
    %38 = vector.shape_cast %37 : vector<128x128xf32> to vector<16x8x128xf32>
    %39 = vector.extract_strided_slice %36 {offsets = [0, 128], sizes = [128, 128], strides = [1, 1]} : vector<128x256xf32> to vector<128x128xf32>
    %40 = vector.shape_cast %39 : vector<128x128xf32> to vector<16x8x128xf32>
    %41 = arith.addf %38, %19 : vector<16x8x128xf32>
    %42 = vector.shape_cast %9 : vector<16x128xf32> to vector<16x1x128xf32>
    %43 = vector.broadcast %42 : vector<16x1x128xf32> to vector<16x8x128xf32>
    %44 = arith.mulf %41, %43 : vector<16x8x128xf32>
    %cst_21 = arith.constant dense<0.000000e+00> : vector<16x8xf32>
    %45 = vector.multi_reduction <add>, %44, %cst_21 [2] : vector<16x8x128xf32> to vector<16x8xf32>
    %cst_22 = arith.constant 0.176776692 : f32
    %46 = vector.broadcast %cst_22 : f32 to vector<16x8xf32>
    %47 = arith.mulf %45, %46 : vector<16x8xf32>
    %cst_23 = arith.constant 0.000000e+00 : f32
    %48 = vector.broadcast %cst_23 : f32 to vector<16x8xf32>
    %49 = arith.cmpf ogt, %2, %48 : vector<16x8xf32>
    %cst_24 = arith.constant -1.000000e+30 : f32
    %50 = vector.broadcast %cst_24 : f32 to vector<16x8xf32>
    %51 = arith.select %49, %47, %50 : vector<16x8xi1>, vector<16x8xf32>
    %cst_25 = arith.constant dense<0xFF800000> : vector<16xf32>
    %52 = vector.multi_reduction <maximumf>, %51, %cst_25 [1] : vector<16x8xf32> to vector<16xf32>
    %53 = vector.shape_cast %52 : vector<16xf32> to vector<16x1xf32>
    %54 = vector.broadcast %53 : vector<16x1xf32> to vector<16x8xf32>
    %55 = arith.subf %51, %54 : vector<16x8xf32>
    %56 = math.exp %55 : vector<16x8xf32>
    %cst_26 = arith.constant dense<0.000000e+00> : vector<16xf32>
    %57 = vector.multi_reduction <add>, %56, %cst_26 [1] : vector<16x8xf32> to vector<16xf32>
    %58 = vector.shape_cast %57 : vector<16xf32> to vector<16x1xf32>
    %59 = tpu.reciprocal %58 {approx = true} : vector<16x1xf32> -> vector<16x1xf32>
    %60 = vector.broadcast %59 : vector<16x1xf32> to vector<16x8xf32>
    %61 = arith.mulf %56, %60 : vector<16x8xf32>
    %62 = vector.shape_cast %61 : vector<16x8xf32> to vector<16x8x1xf32>
    %63 = arith.addf %19, %40 : vector<16x8x128xf32>
    %64 = vector.broadcast %62 : vector<16x8x1xf32> to vector<16x8x128xf32>
    %65 = arith.mulf %64, %63 : vector<16x8x128xf32>
    %cst_27 = arith.constant dense<0.000000e+00> : vector<16x128xf32>
    %66 = vector.multi_reduction <add>, %65, %cst_27 [1] : vector<16x8x128xf32> to vector<16x128xf32>
    %67 = tpu.iota {dimensions = array<i32: 1>} : vector<16x8xi32>
    %cst_28 = arith.constant 0.000000e+00 : f32
    %68 = vector.broadcast %cst_28 : f32 to vector<16x8xf32>
    %69 = arith.cmpf ogt, %2, %68 : vector<16x8xf32>
    %cst_29 = arith.constant -1.000000e+30 : f32
    %70 = vector.broadcast %cst_29 : f32 to vector<16x8xf32>
    %71 = arith.select %69, %3, %70 : vector<16x8xi1>, vector<16x8xf32>
    %cst_30 = arith.constant dense<0xFF800000> : vector<16xf32>
    %72 = vector.multi_reduction <maximumf>, %71, %cst_30 [1] : vector<16x8xf32> to vector<16xf32>
    %73 = vector.shape_cast %72 : vector<16xf32> to vector<16x1xf32>
    %74 = vector.broadcast %73 : vector<16x1xf32> to vector<16x8xf32>
    %75 = arith.cmpf oeq, %71, %74 : vector<16x8xf32>
    %c8_i32 = arith.constant 8 : i32
    %76 = vector.broadcast %c8_i32 : i32 to vector<16x8xi32>
    %77 = arith.select %75, %67, %76 : vector<16x8xi1>, vector<16x8xi32>
    %cst_31 = arith.constant dense<2147483647> : vector<16xi32>
    %78 = vector.multi_reduction <minsi>, %77, %cst_31 [1] : vector<16x8xi32> to vector<16xi32>
    %79 = vector.shape_cast %78 : vector<16xi32> to vector<16x1xi32>
    %80 = vector.broadcast %79 : vector<16x1xi32> to vector<16x8xi32>
    %81 = arith.cmpi eq, %67, %80 : vector<16x8xi32>
    %82 = arith.extui %81 : vector<16x8xi1> to vector<16x8xi32>
    %83 = arith.sitofp %82 : vector<16x8xi32> to vector<16x8xf32>
    %84 = vector.shape_cast %83 : vector<16x8xf32> to vector<16x8x1xf32>
    %85 = vector.broadcast %84 : vector<16x8x1xf32> to vector<16x8x128xf32>
    %86 = arith.mulf %85, %19 : vector<16x8x128xf32>
    %cst_32 = arith.constant dense<0.000000e+00> : vector<16x128xf32>
    %87 = vector.multi_reduction <add>, %86, %cst_32 [1] : vector<16x8x128xf32> to vector<16x128xf32>
    %88 = vector.shape_cast %87 : vector<16x128xf32> to vector<16x1x128xf32>
    %89 = vector.broadcast %88 : vector<16x1x128xf32> to vector<16x8x128xf32>
    %90 = arith.mulf %89, %19 : vector<16x8x128xf32>
    %cst_33 = arith.constant dense<0.000000e+00> : vector<16x8xf32>
    %91 = vector.multi_reduction <add>, %90, %cst_33 [2] : vector<16x8x128xf32> to vector<16x8xf32>
    %cst_34 = arith.constant 0.176776692 : f32
    %92 = vector.broadcast %cst_34 : f32 to vector<16x8xf32>
    %93 = arith.mulf %91, %92 : vector<16x8xf32>
    %cst_35 = arith.constant 0.000000e+00 : f32
    %94 = vector.broadcast %cst_35 : f32 to vector<16x8xf32>
    %95 = arith.cmpf ogt, %2, %94 : vector<16x8xf32>
    %cst_36 = arith.constant -1.000000e+30 : f32
    %96 = vector.broadcast %cst_36 : f32 to vector<16x8xf32>
    %97 = arith.select %95, %93, %96 : vector<16x8xi1>, vector<16x8xf32>
    %cst_37 = arith.constant dense<0xFF800000> : vector<16xf32>
    %98 = vector.multi_reduction <maximumf>, %97, %cst_37 [1] : vector<16x8xf32> to vector<16xf32>
    %99 = vector.shape_cast %98 : vector<16xf32> to vector<16x1xf32>
    %100 = vector.broadcast %99 : vector<16x1xf32> to vector<16x8xf32>
    %101 = arith.subf %97, %100 : vector<16x8xf32>
    %102 = math.exp %101 : vector<16x8xf32>
    %cst_38 = arith.constant dense<0.000000e+00> : vector<16xf32>
    %103 = vector.multi_reduction <add>, %102, %cst_38 [1] : vector<16x8xf32> to vector<16xf32>
    %104 = vector.shape_cast %103 : vector<16xf32> to vector<16x1xf32>
    %105 = tpu.reciprocal %104 {approx = true} : vector<16x1xf32> -> vector<16x1xf32>
    %106 = vector.broadcast %105 : vector<16x1xf32> to vector<16x8xf32>
    %107 = arith.mulf %102, %106 : vector<16x8xf32>
    %108 = vector.shape_cast %107 : vector<16x8xf32> to vector<16x8x1xf32>
    %109 = vector.broadcast %108 : vector<16x8x1xf32> to vector<16x8x128xf32>
    %110 = arith.mulf %109, %19 : vector<16x8x128xf32>
    %cst_39 = arith.constant dense<0.000000e+00> : vector<16x128xf32>
    %111 = vector.multi_reduction <add>, %110, %cst_39 [1] : vector<16x8x128xf32> to vector<16x128xf32>
    %112 = tpu.concatenate %66, %111 in 1 : vector<16x128xf32>, vector<16x128xf32> -> vector<16x256xf32>
    %cst_40 = arith.constant dense<0.000000e+00> : vector<16x128xf32>
    %113 = tpu.matmul %112, %8, %cst_40 {dimension_numbers = #tpu.dot_dimension_numbers<[1], [0], [0], [1], [0, 0, 1, 1], [], []>} : vector<16x256xf32>, vector<256x128xf32>, vector<16x128xf32> -> vector<16x128xf32>
    %114 = arith.addf %113, %0 : vector<16x128xf32>
    %cst_41 = arith.constant 0.000000e+00 : f32
    %115 = vector.broadcast %cst_41 : f32 to vector<16x128xf32>
    %116 = arith.cmpf ogt, %114, %115 : vector<16x128xf32>
    %117 = math.exp %114 : vector<16x128xf32>
    %cst_42 = arith.constant 1.000000e+00 : f32
    %118 = vector.broadcast %cst_42 : f32 to vector<16x128xf32>
    %119 = arith.subf %117, %118 : vector<16x128xf32>
    %120 = arith.select %116, %114, %119 : vector<16x128xi1>, vector<16x128xf32>
    %c0_43 = arith.constant 0 : index
    %c0_44 = arith.constant 0 : index
    %121 = vector.load %arg10[%c0_43, %c0_44] : memref<16x128xf32, #tpu.memory_space<vmem>>, vector<16x128xf32>
    tpu.vector_store %arg10[%c0_43, %c0_44], %120 {strides = array<i32>} : memref<16x128xf32, #tpu.memory_space<vmem>>, vector<16x128xf32>,
    return
  }
  func.func @transform_0(%arg0: i32) -> (i32, i32) {
    %c0_i32 = arith.constant 0 : i32
    %c0_i32_0 = arith.constant 0 : i32
    return %arg0, %c0_i32 : i32, i32
  }
  func.func @transform_1(%arg0: i32) -> (i32, i32) {
    %c0_i32 = arith.constant 0 : i32
    %c0_i32_0 = arith.constant 0 : i32
    return %arg0, %c0_i32 : i32, i32
  }
  func.func @transform_2(%arg0: i32) -> (i32, i32) {
    %c0_i32 = arith.constant 0 : i32
    %c0_i32_0 = arith.constant 0 : i32
    return %arg0, %c0_i32 : i32, i32
  }
  func.func @transform_3(%arg0: i32) -> (i32, i32) {
    %c0_i32 = arith.constant 0 : i32
    %c0_i32_0 = arith.constant 0 : i32
    return %arg0, %c0_i32 : i32, i32
  }
  func.func @transform_4(%arg0: i32) -> (i32, i32) {
    %c0_i32 = arith.constant 0 : i32
    %c0_i32_0 = arith.constant 0 : i32
    %c0_i32_1 = arith.constant 0 : i32
    return %c0_i32, %c0_i32_0 : i32, i32
  }
  func.func @transform_5(%arg0: i32) -> (i32, i32) {
    %c0_i32 = arith.constant 0 : i32
    %c0_i32_0 = arith.constant 0 : i32
    %c0_i32_1 = arith.constant 0 : i32
    return %c0_i32, %c0_i32_0 : i32, i32
  }
  func.func @transform_6(%arg0: i32) -> (i32, i32) {
    %c0_i32 = arith.constant 0 : i32
    %c0_i32_0 = arith.constant 0 : i32
    %c0_i32_1 = arith.constant 0 : i32
    return %c0_i32, %c0_i32_0 : i32, i32
  }
  func.func @transform_7(%arg0: i32) -> (i32, i32) {
    %c0_i32 = arith.constant 0 : i32
    %c0_i32_0 = arith.constant 0 : i32
    %c0_i32_1 = arith.constant 0 : i32
    return %c0_i32, %c0_i32_0 : i32, i32
  }
  func.func @transform_8(%arg0: i32) -> (i32, i32) {
    %c0_i32 = arith.constant 0 : i32
    %c0_i32_0 = arith.constant 0 : i32
    %c0_i32_1 = arith.constant 0 : i32
    return %c0_i32, %c0_i32_0 : i32, i32
  }
  func.func @transform_9(%arg0: i32) -> (i32, i32) {
    %c0_i32 = arith.constant 0 : i32
    %c0_i32_0 = arith.constant 0 : i32
    return %arg0, %c0_i32 : i32, i32
  }
}

</mosaic_0001>

<llo_original>
// kernel: tpu_custom_call.1
$region0: #{tpu_custom_call.1}
  #allocation0 [shape = 'u32[]', space=smem, size = 0x4, offset = 0x4, fixed_abs, tag = 'smem constant byte address 0x4 - core index']
  #allocation1 [shape = 'u32[72,128]{1,0:T(1,128)}', space=vmem, size = 0x9000, scoped, tag = 'internal scratch']
  %s0 = inlined_call_operand.vmem [shape: f32[16,128], index: 0, kind: input, shape index: {}]
  %s1 = inlined_call_operand.vmem [shape: s32[16,8], index: 1, kind: input, shape index: {}]
  %s2 = inlined_call_operand.vmem [shape: f32[16,8], index: 2, kind: input, shape index: {}]
  %s3 = inlined_call_operand.vmem [shape: f32[16,8], index: 3, kind: input, shape index: {}]
  %s4 = inlined_call_operand.vmem [shape: f32[24,128], index: 4, kind: input, shape index: {}]
  %s5 = inlined_call_operand.hbm [shape: f32[128,128], index: 5, kind: input, shape index: {}]
  %s6 = inlined_call_operand.hbm [shape: f32[128,128], index: 6, kind: input, shape index: {}]
  %s7 = inlined_call_operand.vmem [shape: f32[8,256], index: 7, kind: input, shape index: {}]
  %s8 = inlined_call_operand.hbm [shape: f32[256,128], index: 8, kind: input, shape index: {}]
  %s9 = inlined_call_operand.hbm [shape: f32[16,128], index: 9, kind: output, shape index: {}]
  %s10 = sld [smem:[#allocation0]]
  $region58: #{tpu_custom_call.1} parent=0
    _
  %s12 = ssub.s32 1, %s10
  %s13 = scalar_select 0, %s12, %s10
  $region1: #{tpu_custom_call.1} parent=0
    #allocation2 [shape = 'u8[65536]{0}', space=vmem, size = 0x10000, scoped, tag = 'input window, operand 5, single buffered']
    #allocation3 [shape = 's32[1]{0}', space=sflag, size = 0x4, scoped, tag = 'scoped memory for tpu_custom_call.1']
    #allocation4 [shape = 's32[1]{0}', space=sflag, size = 0x4, scoped, tag = 'scoped memory for tpu_custom_call.1']
    #allocation5 [shape = 'u8[65536]{0}', space=vmem, size = 0x10000, scoped, tag = 'input window, operand 6, single buffered']
    #allocation6 [shape = 's32[1]{0}', space=sflag, size = 0x4, scoped, tag = 'scoped memory for tpu_custom_call.1']
    #allocation7 [shape = 'u8[131072]{0}', space=vmem, size = 0x20000, scoped, tag = 'input window, operand 8, single buffered']
    #allocation8 [shape = 'u8[8192]{0}', space=vmem, size = 0x2000, scoped, tag = 'output window, operand 0, single buffered']
    %14 = vsyncpa [#allocation3], 0
    %15 = vsyncpa [#allocation6], 0
    %16 = vsyncpa [#allocation4], 0
    // Predicated region
    $region2: #{tpu_custom_call.1} parent=1 // pred_check
      _
    $region3: #{tpu_custom_call.1} parent=1 // pred_check_branch
      %18 = sbr.rel (0) target = $region5
    $region4: #{tpu_custom_call.1} parent=1 // pred_region
      _
    $region5: #{tpu_custom_call.1} parent=1 // pred_fallthru
      _
    // Predicated region
    $region6: #{tpu_custom_call.1} parent=1 // pred_check
      _
    $region7: #{tpu_custom_call.1} parent=1 // pred_check_branch
      %20 = sbr.rel (0) target = $region9
    $region8: #{tpu_custom_call.1} parent=1 // pred_region
      _
    $region9: #{tpu_custom_call.1} parent=1 // pred_fallthru
      _
    // Predicated region
    $region10: #{tpu_custom_call.1} parent=1 // pred_check
      _
    $region11: #{tpu_custom_call.1} parent=1 // pred_check_branch
      %22 = sbr.rel (0) target = $region13
    $region12: #{tpu_custom_call.1} parent=1 // pred_region
      _
    $region13: #{tpu_custom_call.1} parent=1 // pred_fallthru
      _
    // Predicated region
    $region14: #{tpu_custom_call.1} parent=1 // pred_check
      _
    $region15: #{tpu_custom_call.1} parent=1 // pred_check_branch
      %24 = sbr.rel (0) target = $region17
    $region16: #{tpu_custom_call.1} parent=1 // pred_region
      _
    $region17: #{tpu_custom_call.1} parent=1 // pred_fallthru
      _
    // Predicated region
    $region18: #{tpu_custom_call.1} parent=1 // pred_check
      _
    $region19: #{tpu_custom_call.1} parent=1 // pred_check_branch
      %26 = sbr.rel (0) target = $region21
    $region20: #{tpu_custom_call.1} parent=1 // pred_region
      _
    $region21: #{tpu_custom_call.1} parent=1 // pred_fallthru
      _
    // Predicated region
    $region22: #{tpu_custom_call.1} parent=1 // pred_check
      _
    $region23: #{tpu_custom_call.1} parent=1 // pred_check_branch
      %28 = sbr.rel (0) target = $region25
    $region24: #{tpu_custom_call.1} parent=1 // pred_region
      %30 = vsyncadd [#allocation3], 0
      %s31 = sshll.u32 %s5, 4
      %s32 = int_to_ptr.hbm [resolvable:$true] %s31
      %s33 = sshll.u32 [#allocation2], 4
      %s34 = int_to_ptr.vmem [resolvable:$true] %s33
      %39 = dma.hbm_to_vmem [thread:$0]  %s32, 2048, %s34, [#allocation3], 128, 128, 8
    $region25: #{tpu_custom_call.1} parent=1 // pred_fallthru
      _
    // Predicated region
    $region26: #{tpu_custom_call.1} parent=1 // pred_check
      _
    $region27: #{tpu_custom_call.1} parent=1 // pred_check_branch
      %41 = sbr.rel (0) target = $region29
    $region28: #{tpu_custom_call.1} parent=1 // pred_region
      %43 = vsyncadd [#allocation6], 0
      %s44 = sshll.u32 %s6, 4
      %s45 = int_to_ptr.hbm [resolvable:$true] %s44
      %s46 = sshll.u32 [#allocation5], 4
      %s47 = int_to_ptr.vmem [resolvable:$true] %s46
      %52 = dma.hbm_to_vmem [thread:$0]  %s45, 2048, %s47, [#allocation6], 128, 128, 8
    $region29: #{tpu_custom_call.1} parent=1 // pred_fallthru
      _
    // Predicated region
    $region30: #{tpu_custom_call.1} parent=1 // pred_check
      _
    $region31: #{tpu_custom_call.1} parent=1 // pred_check_branch
      %54 = sbr.rel (0) target = $region33
    $region32: #{tpu_custom_call.1} parent=1 // pred_region
      _
    $region33: #{tpu_custom_call.1} parent=1 // pred_fallthru
      _
    // Predicated region
    $region34: #{tpu_custom_call.1} parent=1 // pred_check
      _
    $region35: #{tpu_custom_call.1} parent=1 // pred_check_branch
      %56 = sbr.rel (0) target = $region37
    $region36: #{tpu_custom_call.1} parent=1 // pred_region
      %58 = vsyncadd [#allocation6], 0
      %s59 = sshll.u32 %s8, 4
      %s60 = int_to_ptr.hbm [resolvable:$true] %s59
      %s61 = sshll.u32 [#allocation7], 4
      %s62 = int_to_ptr.vmem [resolvable:$true] %s61
      %67 = dma.hbm_to_vmem [thread:$0]  %s60, 4096, %s62, [#allocation6], 128, 128, 8
    $region37: #{tpu_custom_call.1} parent=1 // pred_fallthru
      _
    // Predicated region
    $region38: #{tpu_custom_call.1} parent=1 // pred_check
      _
    $region39: #{tpu_custom_call.1} parent=1 // pred_check_branch
      %69 = sbr.rel (0) target = $region41
    $region40: #{tpu_custom_call.1} parent=1 // pred_region
      %71 = dma.done [#allocation3], 2048
    $region41: #{tpu_custom_call.1} parent=1 // pred_fallthru
      _
    // Predicated region
    $region42: #{tpu_custom_call.1} parent=1 // pred_check
      _
    $region43: #{tpu_custom_call.1} parent=1 // pred_check_branch
      %73 = sbr.rel (0) target = $region45
    $region44: #{tpu_custom_call.1} parent=1 // pred_region
      %75 = dma.done [#allocation6], 2048
    $region45: #{tpu_custom_call.1} parent=1 // pred_fallthru
      _
    // Predicated region
    $region46: #{tpu_custom_call.1} parent=1 // pred_check
      _
    $region47: #{tpu_custom_call.1} parent=1 // pred_check_branch
      %77 = sbr.rel (0) target = $region49
    $region48: #{tpu_custom_call.1} parent=1 // pred_region
      %79 = dma.done [#allocation6], 4096
    $region49: #{tpu_custom_call.1} parent=1 // pred_fallthru
      _
    %v80 = vld [vmem:[%s0] sm:$0xff]
    %v81 = vld [vmem:[%s0 + $0x8] sm:$0xff]
    %v82 = vld [vmem:[%s1] sm:$0xff]
    %v83 = vld [vmem:[%s1 + $0x8] sm:$0xff]
    %v84 = vld [vmem:[%s2] sm:$0xff]
    %v85 = vld [vmem:[%s2 + $0x8] sm:$0xff]
    %v86 = vld [vmem:[%s3] sm:$0xff]
    %v87 = vld [vmem:[%s3 + $0x8] sm:$0xff]
    %v88 = vld [vmem:[%s4] sm:$0xff]
    %v89 = vld [vmem:[%s4 + $0x8] sm:$0xff]
    %v90 = vld [vmem:[%s4 + $0x10] sm:$0xff]
    %v91 = vld [vmem:[#allocation2] sm:$0xff]
    %v92 = vld [vmem:[#allocation2 + $0x8] sm:$0xff]
    %v93 = vld [vmem:[#allocation2 + $0x10] sm:$0xff]
    %v94 = vld [vmem:[#allocation2 + $0x18] sm:$0xff]
    %v95 = vld [vmem:[#allocation2 + $0x20] sm:$0xff]
    %v96 = vld [vmem:[#allocation2 + $0x28] sm:$0xff]
    %v97 = vld [vmem:[#allocation2 + $0x30] sm:$0xff]
    %v98 = vld [vmem:[#allocation2 + $0x38] sm:$0xff]
    %v99 = vld [vmem:[#allocation2 + $0x40] sm:$0xff]
    %v100 = vld [vmem:[#allocation2 + $0x48] sm:$0xff]
    %v101 = vld [vmem:[#allocation2 + $0x50] sm:$0xff]
    %v102 = vld [vmem:[#allocation2 + $0x58] sm:$0xff]
    %v103 = vld [vmem:[#allocation2 + $0x60] sm:$0xff]
    %v104 = vld [vmem:[#allocation2 + $0x68] sm:$0xff]
    %v105 = vld [vmem:[#allocation2 + $0x70] sm:$0xff]
    %v106 = vld [vmem:[#allocation2 + $0x78] sm:$0xff]
    %v107 = vld [vmem:[#allocation5] sm:$0xff]
    %v108 = vld [vmem:[#allocation5 + $0x8] sm:$0xff]
    %v109 = vld [vmem:[#allocation5 + $0x10] sm:$0xff]
    %v110 = vld [vmem:[#allocation5 + $0x18] sm:$0xff]
    %v111 = vld [vmem:[#allocation5 + $0x20] sm:$0xff]
    %v112 = vld [vmem:[#allocation5 + $0x28] sm:$0xff]
    %v113 = vld [vmem:[#allocation5 + $0x30] sm:$0xff]
    %v114 = vld [vmem:[#allocation5 + $0x38] sm:$0xff]
    %v115 = vld [vmem:[#allocation5 + $0x40] sm:$0xff]
    %v116 = vld [vmem:[#allocation5 + $0x48] sm:$0xff]
    %v117 = vld [vmem:[#allocation5 + $0x50] sm:$0xff]
    %v118 = vld [vmem:[#allocation5 + $0x58] sm:$0xff]
    %v119 = vld [vmem:[#allocation5 + $0x60] sm:$0xff]
    %v120 = vld [vmem:[#allocation5 + $0x68] sm:$0xff]
    %v121 = vld [vmem:[#allocation5 + $0x70] sm:$0xff]
    %v122 = vld [vmem:[#allocation5 + $0x78] sm:$0xff]
    %v123 = vld [vmem:[%s7] sm:$0xff]
    %v124 = vld [vmem:[%s7 + $0x8] sm:$0xff]
    %v125 = vld [vmem:[#allocation7] sm:$0xff]
    %v126 = vld [vmem:[#allocation7 + $0x8] sm:$0xff]
    %v127 = vld [vmem:[#allocation7 + $0x10] sm:$0xff]
    %v128 = vld [vmem:[#allocation7 + $0x18] sm:$0xff]
    %v129 = vld [vmem:[#allocation7 + $0x20] sm:$0xff]
    %v130 = vld [vmem:[#allocation7 + $0x28] sm:$0xff]
    %v131 = vld [vmem:[#allocation7 + $0x30] sm:$0xff]
    %v132 = vld [vmem:[#allocation7 + $0x38] sm:$0xff]
    %v133 = vld [vmem:[#allocation7 + $0x40] sm:$0xff]
    %v134 = vld [vmem:[#allocation7 + $0x48] sm:$0xff]
    %v135 = vld [vmem:[#allocation7 + $0x50] sm:$0xff]
    %v136 = vld [vmem:[#allocation7 + $0x58] sm:$0xff]
    %v137 = vld [vmem:[#allocation7 + $0x60] sm:$0xff]
    %v138 = vld [vmem:[#allocation7 + $0x68] sm:$0xff]
    %v139 = vld [vmem:[#allocation7 + $0x70] sm:$0xff]
    %v140 = vld [vmem:[#allocation7 + $0x78] sm:$0xff]
    %v141 = vld [vmem:[#allocation7 + $0x80] sm:$0xff]
    %v142 = vld [vmem:[#allocation7 + $0x88] sm:$0xff]
    %v143 = vld [vmem:[#allocation7 + $0x90] sm:$0xff]
    %v144 = vld [vmem:[#allocation7 + $0x98] sm:$0xff]
    %v145 = vld [vmem:[#allocation7 + $0xa0] sm:$0xff]
    %v146 = vld [vmem:[#allocation7 + $0xa8] sm:$0xff]
    %v147 = vld [vmem:[#allocation7 + $0xb0] sm:$0xff]
    %v148 = vld [vmem:[#allocation7 + $0xb8] sm:$0xff]
    %v149 = vld [vmem:[#allocation7 + $0xc0] sm:$0xff]
    %v150 = vld [vmem:[#allocation7 + $0xc8] sm:$0xff]
    %v151 = vld [vmem:[#allocation7 + $0xd0] sm:$0xff]
    %v152 = vld [vmem:[#allocation7 + $0xd8] sm:$0xff]
    %v153 = vld [vmem:[#allocation7 + $0xe0] sm:$0xff]
    %v154 = vld [vmem:[#allocation7 + $0xe8] sm:$0xff]
    %v155 = vld [vmem:[#allocation7 + $0xf0] sm:$0xff]
    %v156 = vld [vmem:[#allocation7 + $0xf8] sm:$0xff]
    %157 = vmatpush.msra.mxu0 %v106
    %158 = vmatpush.msra.mxu0 %v105
    %159 = vmatpush.msra.mxu0 %v104
    %160 = vmatpush.msra.mxu0 %v103
    %161 = vmatpush.msra.mxu0 %v102
    %162 = vmatpush.msra.mxu0 %v101
    %163 = vmatpush.msra.mxu0 %v100
    %164 = vmatpush.msra.mxu0 %v99
    %165 = vmatpush.msra.mxu0 %v98
    %166 = vmatpush.msra.mxu0 %v97
    %167 = vmatpush.msra.mxu0 %v96
    %168 = vmatpush.msra.mxu0 %v95
    %169 = vmatpush.msra.mxu0 %v94
    %170 = vmatpush.msra.mxu0 %v93
    %171 = vmatpush.msra.mxu0 %v92
    %172 = vmatpush.msra.mxu0 %v91
    %173 = vmatmul.f32.gmra.mxu0 %v80
    %v174 = vpop.f32.mrf.mxu0
    %v175 = vadd.f32 0.0, %v174
    %176 = vmatmul.f32.gmra.mxu0 %v81
    %v177 = vpop.f32.mrf.mxu0
    %v178 = vadd.f32 0.0, %v177
    %179 = vdwg.mxu0
    %180 = vmatpush.msra.mxu0 %v122
    %181 = vmatpush.msra.mxu0 %v121
    %182 = vmatpush.msra.mxu0 %v120
    %183 = vmatpush.msra.mxu0 %v119
    %184 = vmatpush.msra.mxu0 %v118
    %185 = vmatpush.msra.mxu0 %v117
    %186 = vmatpush.msra.mxu0 %v116
    %187 = vmatpush.msra.mxu0 %v115
    %188 = vmatpush.msra.mxu0 %v114
    %189 = vmatpush.msra.mxu0 %v113
    %190 = vmatpush.msra.mxu0 %v112
    %191 = vmatpush.msra.mxu0 %v111
    %192 = vmatpush.msra.mxu0 %v110
    %193 = vmatpush.msra.mxu0 %v109
    %194 = vmatpush.msra.mxu0 %v108
    %195 = vmatpush.msra.mxu0 %v107
    %196 = vmatmul.f32.gmra.mxu0 %v88
    %v197 = vpop.f32.mrf.mxu0
    %v198 = vadd.f32 0.0, %v197
    %199 = vmatmul.f32.gmra.mxu0 %v89
    %v200 = vpop.f32.mrf.mxu0
    %v201 = vadd.f32 0.0, %v200
    %202 = vmatmul.f32.gmra.mxu0 %v90
    %v203 = vpop.f32.mrf.mxu0
    %v204 = vadd.f32 0.0, %v203
    %205 = vdwg.mxu0
    %v206 = vlaneseq
    %v207 = vand.u32 %v206, 127
    %v208 = vperm.slane %v82, 0
    %v209 = vlaneseq
    %v210 = vshrl.u32 %v209, 7
    %212 = vset.pattern.permute.xlu0 %v210
    %213 = vperm.xlu0 %212, %v208
    %v214 = vpop.permute.xlu0 %213
    %v215 = vperm.slane %v82, 1
    %v216 = vlaneseq
    %v217 = vshrl.u32 %v216, 7
    %219 = vset.pattern.permute.xlu0 %v217
    %220 = vperm.xlu0 %219, %v215
    %v221 = vpop.permute.xlu0 %220
    %v222 = vperm.slane %v82, 2
    %v223 = vlaneseq
    %v224 = vshrl.u32 %v223, 7
    %226 = vset.pattern.permute.xlu0 %v224
    %227 = vperm.xlu0 %226, %v222
    %v228 = vpop.permute.xlu0 %227
    %v229 = vperm.slane %v82, 3
    %v230 = vlaneseq
    %v231 = vshrl.u32 %v230, 7
    %233 = vset.pattern.permute.xlu0 %v231
    %234 = vperm.xlu0 %233, %v229
    %v235 = vpop.permute.xlu0 %234
    %v236 = vperm.slane %v82, 4
    %v237 = vlaneseq
    %v238 = vshrl.u32 %v237, 7
    %240 = vset.pattern.permute.xlu0 %v238
    %241 = vperm.xlu0 %240, %v236
    %v242 = vpop.permute.xlu0 %241
    %v243 = vperm.slane %v82, 5
    %v244 = vlaneseq
    %v245 = vshrl.u32 %v244, 7
    %247 = vset.pattern.permute.xlu0 %v245
    %248 = vperm.xlu0 %247, %v243
    %v249 = vpop.permute.xlu0 %248
    %v250 = vperm.slane %v82, 6
    %v251 = vlaneseq
    %v252 = vshrl.u32 %v251, 7
    %254 = vset.pattern.permute.xlu0 %v252
    %255 = vperm.xlu0 %254, %v250
    %v256 = vpop.permute.xlu0 %255
    %v257 = vperm.slane %v82, 7
    %v258 = vlaneseq
    %v259 = vshrl.u32 %v258, 7
    %261 = vset.pattern.permute.xlu0 %v259
    %262 = vperm.xlu0 %261, %v257
    %v263 = vpop.permute.xlu0 %262
    %v264 = vperm.slane %v83, 0
    %v265 = vlaneseq
    %v266 = vshrl.u32 %v265, 7
    %268 = vset.pattern.permute.xlu0 %v266
    %269 = vperm.xlu0 %268, %v264
    %v270 = vpop.permute.xlu0 %269
    %v271 = vperm.slane %v83, 1
    %v272 = vlaneseq
    %v273 = vshrl.u32 %v272, 7
    %275 = vset.pattern.permute.xlu0 %v273
    %276 = vperm.xlu0 %275, %v271
    %v277 = vpop.permute.xlu0 %276
    %v278 = vperm.slane %v83, 2
    %v279 = vlaneseq
    %v280 = vshrl.u32 %v279, 7
    %282 = vset.pattern.permute.xlu0 %v280
    %283 = vperm.xlu0 %282, %v278
    %v284 = vpop.permute.xlu0 %283
    %v285 = vperm.slane %v83, 3
    %v286 = vlaneseq
    %v287 = vshrl.u32 %v286, 7
    %289 = vset.pattern.permute.xlu0 %v287
    %290 = vperm.xlu0 %289, %v285
    %v291 = vpop.permute.xlu0 %290
    %v292 = vperm.slane %v83, 4
    %v293 = vlaneseq
    %v294 = vshrl.u32 %v293, 7
    %296 = vset.pattern.permute.xlu0 %v294
    %297 = vperm.xlu0 %296, %v292
    %v298 = vpop.permute.xlu0 %297
    %v299 = vperm.slane %v83, 5
    %v300 = vlaneseq
    %v301 = vshrl.u32 %v300, 7
    %303 = vset.pattern.permute.xlu0 %v301
    %304 = vperm.xlu0 %303, %v299
    %v305 = vpop.permute.xlu0 %304
    %v306 = vperm.slane %v83, 6
    %v307 = vlaneseq
    %v308 = vshrl.u32 %v307, 7
    %310 = vset.pattern.permute.xlu0 %v308
    %311 = vperm.xlu0 %310, %v306
    %v312 = vpop.permute.xlu0 %311
    %v313 = vperm.slane %v83, 7
    %v314 = vlaneseq
    %v315 = vshrl.u32 %v314, 7
    %317 = vset.pattern.permute.xlu0 %v315
    %318 = vperm.xlu0 %317, %v313
    %v319 = vpop.permute.xlu0 %318
    %vm320 = vcmp.eq.s32.totalorder %v207, %v214
    %vm321 = vcmp.eq.s32.totalorder %v207, %v221
    %vm322 = vcmp.eq.s32.totalorder %v207, %v228
    %vm323 = vcmp.eq.s32.totalorder %v207, %v235
    %vm324 = vcmp.eq.s32.totalorder %v207, %v242
    %vm325 = vcmp.eq.s32.totalorder %v207, %v249
    %vm326 = vcmp.eq.s32.totalorder %v207, %v256
    %vm327 = vcmp.eq.s32.totalorder %v207, %v263
    %vm328 = vcmp.eq.s32.totalorder %v207, %v270
    %vm329 = vcmp.eq.s32.totalorder %v207, %v277
    %vm330 = vcmp.eq.s32.totalorder %v207, %v284
    %vm331 = vcmp.eq.s32.totalorder %v207, %v291
    %vm332 = vcmp.eq.s32.totalorder %v207, %v298
    %vm333 = vcmp.eq.s32.totalorder %v207, %v305
    %vm334 = vcmp.eq.s32.totalorder %v207, %v312
    %vm335 = vcmp.eq.s32.totalorder %v207, %v319
    %v336 = vsel %vm320, 1, 0
    %v337 = vsel %vm321, 1, 0
    %v338 = vsel %vm322, 1, 0
    %v339 = vsel %vm323, 1, 0
    %v340 = vsel %vm324, 1, 0
    %v341 = vsel %vm325, 1, 0
    %v342 = vsel %vm326, 1, 0
    %v343 = vsel %vm327, 1, 0
    %v344 = vsel %vm328, 1, 0
    %v345 = vsel %vm329, 1, 0
    %v346 = vsel %vm330, 1, 0
    %v347 = vsel %vm331, 1, 0
    %v348 = vsel %vm332, 1, 0
    %v349 = vsel %vm333, 1, 0
    %v350 = vsel %vm334, 1, 0
    %v351 = vsel %vm335, 1, 0
    %v352 = vcvt.s32.f32 %v336
    %v353 = vcvt.s32.f32 %v337
    %v354 = vcvt.s32.f32 %v338
    %v355 = vcvt.s32.f32 %v339
    %v356 = vcvt.s32.f32 %v340
    %v357 = vcvt.s32.f32 %v341
    %v358 = vcvt.s32.f32 %v342
    %v359 = vcvt.s32.f32 %v343
    %v360 = vcvt.s32.f32 %v344
    %v361 = vcvt.s32.f32 %v345
    %v362 = vcvt.s32.f32 %v346
    %v363 = vcvt.s32.f32 %v347
    %v364 = vcvt.s32.f32 %v348
    %v365 = vcvt.s32.f32 %v349
    %v366 = vcvt.s32.f32 %v350
    %v367 = vcvt.s32.f32 %v351
    %vm368 = vcmask 195584
    %v370 = vsel %vm368, %v352, 0
    %v373 = vsel %vm368, %v353, 0
    %v376 = vsel %vm368, %v354, 0
    %v379 = vsel %vm368, %v355, 0
    %v382 = vsel %vm368, %v356, 0
    %v385 = vsel %vm368, %v357, 0
    %v388 = vsel %vm368, %v358, 0
    %v391 = vsel %vm368, %v359, 0
    %v394 = vsel %vm368, %v360, 0
    %v397 = vsel %vm368, %v361, 0
    %v400 = vsel %vm368, %v362, 0
    %v403 = vsel %vm368, %v363, 0
    %v406 = vsel %vm368, %v364, 0
    %v409 = vsel %vm368, %v365, 0
    %v412 = vsel %vm368, %v366, 0
    %v415 = vsel %vm368, %v367, 0
    %417 = vmatpush.msra.mxu0 0.0
    %418 = vmatpush.msra.mxu0 0.0
    %419 = vmatpush.msra.mxu0 0.0
    %420 = vmatpush.msra.mxu0 0.0
    %421 = vmatpush.msra.mxu0 0.0
    %422 = vmatpush.msra.mxu0 0.0
    %423 = vmatpush.msra.mxu0 0.0
    %424 = vmatpush.msra.mxu0 0.0
    %425 = vmatpush.msra.mxu0 0.0
    %426 = vmatpush.msra.mxu0 0.0
    %427 = vmatpush.msra.mxu0 0.0
    %428 = vmatpush.msra.mxu0 0.0
    %429 = vmatpush.msra.mxu0 0.0
    %430 = vmatpush.msra.mxu0 %v204
    %431 = vmatpush.msra.mxu0 %v201
    %432 = vmatpush.msra.mxu0 %v198
    %433 = vmatmul.f32.gmra.mxu0 %v370
    %v434 = vpop.f32.mrf.mxu0
    %v435 = vadd.f32 0.0, %v434
    %436 = vmatmul.f32.gmra.mxu0 %v373
    %v437 = vpop.f32.mrf.mxu0
    %v438 = vadd.f32 0.0, %v437
    %439 = vmatmul.f32.gmra.mxu0 %v376
    %v440 = vpop.f32.mrf.mxu0
    %v441 = vadd.f32 0.0, %v440
    %442 = vmatmul.f32.gmra.mxu0 %v379
    %v443 = vpop.f32.mrf.mxu0
    %v444 = vadd.f32 0.0, %v443
    %445 = vmatmul.f32.gmra.mxu0 %v382
    %v446 = vpop.f32.mrf.mxu0
    %v447 = vadd.f32 0.0, %v446
    %448 = vmatmul.f32.gmra.mxu0 %v385
    %v449 = vpop.f32.mrf.mxu0
    %v450 = vadd.f32 0.0, %v449
    %451 = vmatmul.f32.gmra.mxu0 %v388
    %v452 = vpop.f32.mrf.mxu0
    %v453 = vadd.f32 0.0, %v452
    %454 = vmatmul.f32.gmra.mxu0 %v391
    %v455 = vpop.f32.mrf.mxu0
    %v456 = vadd.f32 0.0, %v455
    %457 = vmatmul.f32.gmra.mxu0 %v394
    %v458 = vpop.f32.mrf.mxu0
    %v459 = vadd.f32 0.0, %v458
    %460 = vmatmul.f32.gmra.mxu0 %v397
    %v461 = vpop.f32.mrf.mxu0
    %v462 = vadd.f32 0.0, %v461
    %463 = vmatmul.f32.gmra.mxu0 %v400
    %v464 = vpop.f32.mrf.mxu0
    %v465 = vadd.f32 0.0, %v464
    %466 = vmatmul.f32.gmra.mxu0 %v403
    %v467 = vpop.f32.mrf.mxu0
    %v468 = vadd.f32 0.0, %v467
    %469 = vmatmul.f32.gmra.mxu0 %v406
    %v470 = vpop.f32.mrf.mxu0
    %v471 = vadd.f32 0.0, %v470
    %472 = vmatmul.f32.gmra.mxu0 %v409
    %v473 = vpop.f32.mrf.mxu0
    %v474 = vadd.f32 0.0, %v473
    %475 = vmatmul.f32.gmra.mxu0 %v412
    %v476 = vpop.f32.mrf.mxu0
    %v477 = vadd.f32 0.0, %v476
    %478 = vmatmul.f32.gmra.mxu0 %v415
    %v479 = vpop.f32.mrf.mxu0
    %v480 = vadd.f32 0.0, %v479
    %481 = vdwg.mxu0
    %v484 = vrot.slane %v86, 1
    %v485 = vrot.slane %v86, 2
    %v486 = vrot.slane %v86, 3
    %v487 = vrot.slane %v86, 4
    %v488 = vrot.slane %v86, 5
    %v489 = vrot.slane %v86, 6
    %v490 = vrot.slane %v86, 7
    %v491 = vrot.slane %v87, 1
    %v492 = vrot.slane %v87, 2
    %v493 = vrot.slane %v87, 3
    %v494 = vrot.slane %v87, 4
    %v495 = vrot.slane %v87, 5
    %v496 = vrot.slane %v87, 6
    %v497 = vrot.slane %v87, 7
    %v498 = vperm.slane %v86, 0
    %v499 = vlaneseq
    %v500 = vshrl.u32 %v499, 7
    %502 = vset.pattern.permute.xlu0 %v500
    %503 = vperm.xlu0 %502, %v498
    %v504 = vpop.permute.xlu0 %503
    %v505 = vperm.slane %v86, 1
    %v506 = vlaneseq
    %v507 = vshrl.u32 %v506, 7
    %509 = vset.pattern.permute.xlu0 %v507
    %510 = vperm.xlu0 %509, %v505
    %v511 = vpop.permute.xlu0 %510
    %v512 = vperm.slane %v86, 2
    %v513 = vlaneseq
    %v514 = vshrl.u32 %v513, 7
    %516 = vset.pattern.permute.xlu0 %v514
    %517 = vperm.xlu0 %516, %v512
    %v518 = vpop.permute.xlu0 %517
    %v519 = vperm.slane %v86, 3
    %v520 = vlaneseq
    %v521 = vshrl.u32 %v520, 7
    %523 = vset.pattern.permute.xlu0 %v521
    %524 = vperm.xlu0 %523, %v519
    %v525 = vpop.permute.xlu0 %524
    %v526 = vperm.slane %v86, 4
    %v527 = vlaneseq
    %v528 = vshrl.u32 %v527, 7
    %530 = vset.pattern.permute.xlu0 %v528
    %531 = vperm.xlu0 %530, %v526
    %v532 = vpop.permute.xlu0 %531
    %v533 = vperm.slane %v86, 5
    %v534 = vlaneseq
    %v535 = vshrl.u32 %v534, 7
    %537 = vset.pattern.permute.xlu0 %v535
    %538 = vperm.xlu0 %537, %v533
    %v539 = vpop.permute.xlu0 %538
    %v540 = vperm.slane %v86, 6
    %v541 = vlaneseq
    %v542 = vshrl.u32 %v541, 7
    %544 = vset.pattern.permute.xlu0 %v542
    %545 = vperm.xlu0 %544, %v540
    %v546 = vpop.permute.xlu0 %545
    %v547 = vperm.slane %v86, 7
    %v548 = vlaneseq
    %v549 = vshrl.u32 %v548, 7
    %551 = vset.pattern.permute.xlu0 %v549
    %552 = vperm.xlu0 %551, %v547
    %v553 = vpop.permute.xlu0 %552
    %v554 = vperm.slane %v87, 0
    %v555 = vlaneseq
    %v556 = vshrl.u32 %v555, 7
    %558 = vset.pattern.permute.xlu0 %v556
    %559 = vperm.xlu0 %558, %v554
    %v560 = vpop.permute.xlu0 %559
    %v561 = vperm.slane %v87, 1
    %v562 = vlaneseq
    %v563 = vshrl.u32 %v562, 7
    %565 = vset.pattern.permute.xlu0 %v563
    %566 = vperm.xlu0 %565, %v561
    %v567 = vpop.permute.xlu0 %566
    %v568 = vperm.slane %v87, 2
    %v569 = vlaneseq
    %v570 = vshrl.u32 %v569, 7
    %572 = vset.pattern.permute.xlu0 %v570
    %573 = vperm.xlu0 %572, %v568
    %v574 = vpop.permute.xlu0 %573
    %v575 = vperm.slane %v87, 3
    %v576 = vlaneseq
    %v577 = vshrl.u32 %v576, 7
    %579 = vset.pattern.permute.xlu0 %v577
    %580 = vperm.xlu0 %579, %v575
    %v581 = vpop.permute.xlu0 %580
    %v582 = vperm.slane %v87, 4
    %v583 = vlaneseq
    %v584 = vshrl.u32 %v583, 7
    %586 = vset.pattern.permute.xlu0 %v584
    %587 = vperm.xlu0 %586, %v582
    %v588 = vpop.permute.xlu0 %587
    %v589 = vperm.slane %v87, 5
    %v590 = vlaneseq
    %v591 = vshrl.u32 %v590, 7
    %593 = vset.pattern.permute.xlu0 %v591
    %594 = vperm.xlu0 %593, %v589
    %v595 = vpop.permute.xlu0 %594
    %v596 = vperm.slane %v87, 6
    %v597 = vlaneseq
    %v598 = vshrl.u32 %v597, 7
    %600 = vset.pattern.permute.xlu0 %v598
    %601 = vperm.xlu0 %600, %v596
    %v602 = vpop.permute.xlu0 %601
    %v603 = vperm.slane %v87, 7
    %v604 = vlaneseq
    %v605 = vshrl.u32 %v604, 7
    %607 = vset.pattern.permute.xlu0 %v605
    %608 = vperm.xlu0 %607, %v603
    %v609 = vpop.permute.xlu0 %608
    %v610 = vperm.slane %v86, 0
    %v611 = vperm.slane %v484, 0
    %v612 = vperm.slane %v485, 0
    %v613 = vperm.slane %v486, 0
    %v614 = vperm.slane %v487, 0
    %v615 = vperm.slane %v488, 0
    %v616 = vperm.slane %v489, 0
    %v617 = vperm.slane %v490, 0
    %v618 = vperm.slane %v87, 0
    %v619 = vperm.slane %v491, 0
    %v620 = vperm.slane %v492, 0
    %v621 = vperm.slane %v493, 0
    %v622 = vperm.slane %v494, 0
    %v623 = vperm.slane %v495, 0
    %v624 = vperm.slane %v496, 0
    %v625 = vperm.slane %v497, 0
    %vm642 = vcmp.lt.f32.partialorder %v610, %v504
    %vm643 = vcmp.lt.f32.partialorder %v611, %v511
    %vm644 = vcmp.lt.f32.partialorder %v612, %v518
    %vm645 = vcmp.lt.f32.partialorder %v613, %v525
    %vm646 = vcmp.lt.f32.partialorder %v614, %v532
    %vm647 = vcmp.lt.f32.partialorder %v615, %v539
    %vm648 = vcmp.lt.f32.partialorder %v616, %v546
    %vm649 = vcmp.lt.f32.partialorder %v617, %v553
    %vm650 = vcmp.lt.f32.partialorder %v618, %v560
    %vm651 = vcmp.lt.f32.partialorder %v619, %v567
    %vm652 = vcmp.lt.f32.partialorder %v620, %v574
    %vm653 = vcmp.lt.f32.partialorder %v621, %v581
    %vm654 = vcmp.lt.f32.partialorder %v622, %v588
    %vm655 = vcmp.lt.f32.partialorder %v623, %v595
    %vm656 = vcmp.lt.f32.partialorder %v624, %v602
    %vm657 = vcmp.lt.f32.partialorder %v625, %v609
    %v658 = vsel %vm642, 1, 0
    %v659 = vsel %vm643, 1, 0
    %v660 = vsel %vm644, 1, 0
    %v661 = vsel %vm645, 1, 0
    %v662 = vsel %vm646, 1, 0
    %v663 = vsel %vm647, 1, 0
    %v664 = vsel %vm648, 1, 0
    %v665 = vsel %vm649, 1, 0
    %v666 = vsel %vm650, 1, 0
    %v667 = vsel %vm651, 1, 0
    %v668 = vsel %vm652, 1, 0
    %v669 = vsel %vm653, 1, 0
    %v670 = vsel %vm654, 1, 0
    %v671 = vsel %vm655, 1, 0
    %v672 = vsel %vm656, 1, 0
    %v673 = vsel %vm657, 1, 0
    %vm674 = vcmask 64512
    %v675 = vsel %vm674, %v658, 0
    %v676 = vand.u32 %v675, 65535
    %v677 = vshrl.u32 %v675, 16
    %v678 = vcvt.s32.f32 %v676
    %v679 = vcvt.s32.f32 %v677
    %680 = vadd.xlane.f32.xlu0 %v678
    %v681 = vpop.xlane.xlu0 %680
    %682 = vadd.xlane.f32.xlu0 %v679
    %v683 = vpop.xlane.xlu0 %682
    %v684 = vcvt.f32.s32 %v681
    %v685 = vcvt.f32.s32 %v683
    %v686 = vshll.u32 %v685, 16
    %v687 = vadd.s32 %v686, %v684
    %v688 = vsel %vm674, %v659, 0
    %v689 = vand.u32 %v688, 65535
    %v690 = vshrl.u32 %v688, 16
    %v691 = vcvt.s32.f32 %v689
    %v692 = vcvt.s32.f32 %v690
    %693 = vadd.xlane.f32.xlu0 %v691
    %v694 = vpop.xlane.xlu0 %693
    %695 = vadd.xlane.f32.xlu0 %v692
    %v696 = vpop.xlane.xlu0 %695
    %v697 = vcvt.f32.s32 %v694
    %v698 = vcvt.f32.s32 %v696
    %v699 = vshll.u32 %v698, 16
    %v700 = vadd.s32 %v699, %v697
    %v701 = vsel %vm674, %v660, 0
    %v702 = vand.u32 %v701, 65535
    %v703 = vshrl.u32 %v701, 16
    %v704 = vcvt.s32.f32 %v702
    %v705 = vcvt.s32.f32 %v703
    %706 = vadd.xlane.f32.xlu0 %v704
    %v707 = vpop.xlane.xlu0 %706
    %708 = vadd.xlane.f32.xlu0 %v705
    %v709 = vpop.xlane.xlu0 %708
    %v710 = vcvt.f32.s32 %v707
    %v711 = vcvt.f32.s32 %v709
    %v712 = vshll.u32 %v711, 16
    %v713 = vadd.s32 %v712, %v710
    %v714 = vsel %vm674, %v661, 0
    %v715 = vand.u32 %v714, 65535
    %v716 = vshrl.u32 %v714, 16
    %v717 = vcvt.s32.f32 %v715
    %v718 = vcvt.s32.f32 %v716
    %719 = vadd.xlane.f32.xlu0 %v717
    %v720 = vpop.xlane.xlu0 %719
    %721 = vadd.xlane.f32.xlu0 %v718
    %v722 = vpop.xlane.xlu0 %721
    %v723 = vcvt.f32.s32 %v720
    %v724 = vcvt.f32.s32 %v722
    %v725 = vshll.u32 %v724, 16
    %v726 = vadd.s32 %v725, %v723
    %v727 = vsel %vm674, %v662, 0
    %v728 = vand.u32 %v727, 65535
    %v729 = vshrl.u32 %v727, 16
    %v730 = vcvt.s32.f32 %v728
    %v731 = vcvt.s32.f32 %v729
    %732 = vadd.xlane.f32.xlu0 %v730
    %v733 = vpop.xlane.xlu0 %732
    %734 = vadd.xlane.f32.xlu0 %v731
    %v735 = vpop.xlane.xlu0 %734
    %v736 = vcvt.f32.s32 %v733
    %v737 = vcvt.f32.s32 %v735
    %v738 = vshll.u32 %v737, 16
    %v739 = vadd.s32 %v738, %v736
    %v740 = vsel %vm674, %v663, 0
    %v741 = vand.u32 %v740, 65535
    %v742 = vshrl.u32 %v740, 16
    %v743 = vcvt.s32.f32 %v741
    %v744 = vcvt.s32.f32 %v742
    %745 = vadd.xlane.f32.xlu0 %v743
    %v746 = vpop.xlane.xlu0 %745
    %747 = vadd.xlane.f32.xlu0 %v744
    %v748 = vpop.xlane.xlu0 %747
    %v749 = vcvt.f32.s32 %v746
    %v750 = vcvt.f32.s32 %v748
    %v751 = vshll.u32 %v750, 16
    %v752 = vadd.s32 %v751, %v749
    %v753 = vsel %vm674, %v664, 0
    %v754 = vand.u32 %v753, 65535
    %v755 = vshrl.u32 %v753, 16
    %v756 = vcvt.s32.f32 %v754
    %v757 = vcvt.s32.f32 %v755
    %758 = vadd.xlane.f32.xlu0 %v756
    %v759 = vpop.xlane.xlu0 %758
    %760 = vadd.xlane.f32.xlu0 %v757
    %v761 = vpop.xlane.xlu0 %760
    %v762 = vcvt.f32.s32 %v759
    %v763 = vcvt.f32.s32 %v761
    %v764 = vshll.u32 %v763, 16
    %v765 = vadd.s32 %v764, %v762
    %v766 = vsel %vm674, %v665, 0
    %v767 = vand.u32 %v766, 65535
    %v768 = vshrl.u32 %v766, 16
    %v769 = vcvt.s32.f32 %v767
    %v770 = vcvt.s32.f32 %v768
    %771 = vadd.xlane.f32.xlu0 %v769
    %v772 = vpop.xlane.xlu0 %771
    %773 = vadd.xlane.f32.xlu0 %v770
    %v774 = vpop.xlane.xlu0 %773
    %v775 = vcvt.f32.s32 %v772
    %v776 = vcvt.f32.s32 %v774
    %v777 = vshll.u32 %v776, 16
    %v778 = vadd.s32 %v777, %v775
    %v779 = vsel %vm674, %v666, 0
    %v780 = vand.u32 %v779, 65535
    %v781 = vshrl.u32 %v779, 16
    %v782 = vcvt.s32.f32 %v780
    %v783 = vcvt.s32.f32 %v781
    %784 = vadd.xlane.f32.xlu0 %v782
    %v785 = vpop.xlane.xlu0 %784
    %786 = vadd.xlane.f32.xlu0 %v783
    %v787 = vpop.xlane.xlu0 %786
    %v788 = vcvt.f32.s32 %v785
    %v789 = vcvt.f32.s32 %v787
    %v790 = vshll.u32 %v789, 16
    %v791 = vadd.s32 %v790, %v788
    %v792 = vsel %vm674, %v667, 0
    %v793 = vand.u32 %v792, 65535
    %v794 = vshrl.u32 %v792, 16
    %v795 = vcvt.s32.f32 %v793
    %v796 = vcvt.s32.f32 %v794
    %797 = vadd.xlane.f32.xlu0 %v795
    %v798 = vpop.xlane.xlu0 %797
    %799 = vadd.xlane.f32.xlu0 %v796
    %v800 = vpop.xlane.xlu0 %799
    %v801 = vcvt.f32.s32 %v798
    %v802 = vcvt.f32.s32 %v800
    %v803 = vshll.u32 %v802, 16
    %v804 = vadd.s32 %v803, %v801
    %v805 = vsel %vm674, %v668, 0
    %v806 = vand.u32 %v805, 65535
    %v807 = vshrl.u32 %v805, 16
    %v808 = vcvt.s32.f32 %v806
    %v809 = vcvt.s32.f32 %v807
    %810 = vadd.xlane.f32.xlu0 %v808
    %v811 = vpop.xlane.xlu0 %810
    %812 = vadd.xlane.f32.xlu0 %v809
    %v813 = vpop.xlane.xlu0 %812
    %v814 = vcvt.f32.s32 %v811
    %v815 = vcvt.f32.s32 %v813
    %v816 = vshll.u32 %v815, 16
    %v817 = vadd.s32 %v816, %v814
    %v818 = vsel %vm674, %v669, 0
    %v819 = vand.u32 %v818, 65535
    %v820 = vshrl.u32 %v818, 16
    %v821 = vcvt.s32.f32 %v819
    %v822 = vcvt.s32.f32 %v820
    %823 = vadd.xlane.f32.xlu0 %v821
    %v824 = vpop.xlane.xlu0 %823
    %825 = vadd.xlane.f32.xlu0 %v822
    %v826 = vpop.xlane.xlu0 %825
    %v827 = vcvt.f32.s32 %v824
    %v828 = vcvt.f32.s32 %v826
    %v829 = vshll.u32 %v828, 16
    %v830 = vadd.s32 %v829, %v827
    %v831 = vsel %vm674, %v670, 0
    %v832 = vand.u32 %v831, 65535
    %v833 = vshrl.u32 %v831, 16
    %v834 = vcvt.s32.f32 %v832
    %v835 = vcvt.s32.f32 %v833
    %836 = vadd.xlane.f32.xlu0 %v834
    %v837 = vpop.xlane.xlu0 %836
    %838 = vadd.xlane.f32.xlu0 %v835
    %v839 = vpop.xlane.xlu0 %838
    %v840 = vcvt.f32.s32 %v837
    %v841 = vcvt.f32.s32 %v839
    %v842 = vshll.u32 %v841, 16
    %v843 = vadd.s32 %v842, %v840
    %v844 = vsel %vm674, %v671, 0
    %v845 = vand.u32 %v844, 65535
    %v846 = vshrl.u32 %v844, 16
    %v847 = vcvt.s32.f32 %v845
    %v848 = vcvt.s32.f32 %v846
    %849 = vadd.xlane.f32.xlu0 %v847
    %v850 = vpop.xlane.xlu0 %849
    %851 = vadd.xlane.f32.xlu0 %v848
    %v852 = vpop.xlane.xlu0 %851
    %v853 = vcvt.f32.s32 %v850
    %v854 = vcvt.f32.s32 %v852
    %v855 = vshll.u32 %v854, 16
    %v856 = vadd.s32 %v855, %v853
    %v857 = vsel %vm674, %v672, 0
    %v858 = vand.u32 %v857, 65535
    %v859 = vshrl.u32 %v857, 16
    %v860 = vcvt.s32.f32 %v858
    %v861 = vcvt.s32.f32 %v859
    %862 = vadd.xlane.f32.xlu0 %v860
    %v863 = vpop.xlane.xlu0 %862
    %864 = vadd.xlane.f32.xlu0 %v861
    %v865 = vpop.xlane.xlu0 %864
    %v866 = vcvt.f32.s32 %v863
    %v867 = vcvt.f32.s32 %v865
    %v868 = vshll.u32 %v867, 16
    %v869 = vadd.s32 %v868, %v866
    %v870 = vsel %vm674, %v673, 0
    %v871 = vand.u32 %v870, 65535
    %v872 = vshrl.u32 %v870, 16
    %v873 = vcvt.s32.f32 %v871
    %v874 = vcvt.s32.f32 %v872
    %875 = vadd.xlane.f32.xlu0 %v873
    %v876 = vpop.xlane.xlu0 %875
    %877 = vadd.xlane.f32.xlu0 %v874
    %v878 = vpop.xlane.xlu0 %877
    %v879 = vcvt.f32.s32 %v876
    %v880 = vcvt.f32.s32 %v878
    %v881 = vshll.u32 %v880, 16
    %v882 = vadd.s32 %v881, %v879
    %v883 = vsub.s32 7, %v687
    %v884 = vsub.s32 7, %v700
    %v885 = vsub.s32 7, %v713
    %v886 = vsub.s32 7, %v726
    %v887 = vsub.s32 7, %v739
    %v888 = vsub.s32 7, %v752
    %v889 = vsub.s32 7, %v765
    %v890 = vsub.s32 7, %v778
    %v891 = vsub.s32 7, %v791
    %v892 = vsub.s32 7, %v804
    %v893 = vsub.s32 7, %v817
    %v894 = vsub.s32 7, %v830
    %v895 = vsub.s32 7, %v843
    %v896 = vsub.s32 7, %v856
    %v897 = vsub.s32 7, %v869
    %v898 = vsub.s32 7, %v882
    %vm899 = vcmp.eq.s32.totalorder %v207, %v883
    %vm900 = vcmp.eq.s32.totalorder %v207, %v884
    %vm901 = vcmp.eq.s32.totalorder %v207, %v885
    %vm902 = vcmp.eq.s32.totalorder %v207, %v886
    %vm903 = vcmp.eq.s32.totalorder %v207, %v887
    %vm904 = vcmp.eq.s32.totalorder %v207, %v888
    %vm905 = vcmp.eq.s32.totalorder %v207, %v889
    %vm906 = vcmp.eq.s32.totalorder %v207, %v890
    %vm907 = vcmp.eq.s32.totalorder %v207, %v891
    %vm908 = vcmp.eq.s32.totalorder %v207, %v892
    %vm909 = vcmp.eq.s32.totalorder %v207, %v893
    %vm910 = vcmp.eq.s32.totalorder %v207, %v894
    %vm911 = vcmp.eq.s32.totalorder %v207, %v895
    %vm912 = vcmp.eq.s32.totalorder %v207, %v896
    %vm913 = vcmp.eq.s32.totalorder %v207, %v897
    %vm914 = vcmp.eq.s32.totalorder %v207, %v898
    %v915 = vsel %vm899, 1, 0
    %v916 = vsel %vm900, 1, 0
    %v917 = vsel %vm901, 1, 0
    %v918 = vsel %vm902, 1, 0
    %v919 = vsel %vm903, 1, 0
    %v920 = vsel %vm904, 1, 0
    %v921 = vsel %vm905, 1, 0
    %v922 = vsel %vm906, 1, 0
    %v923 = vsel %vm907, 1, 0
    %v924 = vsel %vm908, 1, 0
    %v925 = vsel %vm909, 1, 0
    %v926 = vsel %vm910, 1, 0
    %v927 = vsel %vm911, 1, 0
    %v928 = vsel %vm912, 1, 0
    %v929 = vsel %vm913, 1, 0
    %v930 = vsel %vm914, 1, 0
    %v931 = vcvt.s32.f32 %v915
    %v932 = vcvt.s32.f32 %v916
    %v933 = vcvt.s32.f32 %v917
    %v934 = vcvt.s32.f32 %v918
    %v935 = vcvt.s32.f32 %v919
    %v936 = vcvt.s32.f32 %v920
    %v937 = vcvt.s32.f32 %v921
    %v938 = vcvt.s32.f32 %v922
    %v939 = vcvt.s32.f32 %v923
    %v940 = vcvt.s32.f32 %v924
    %v941 = vcvt.s32.f32 %v925
    %v942 = vcvt.s32.f32 %v926
    %v943 = vcvt.s32.f32 %v927
    %v944 = vcvt.s32.f32 %v928
    %v945 = vcvt.s32.f32 %v929
    %v946 = vcvt.s32.f32 %v930
    %v948 = vsel %vm674, %v931, 0
    %v951 = vsel %vm674, %v932, 0
    %v954 = vsel %vm674, %v933, 0
    %v957 = vsel %vm674, %v934, 0
    %v960 = vsel %vm674, %v935, 0
    %v963 = vsel %vm674, %v936, 0
    %v966 = vsel %vm674, %v937, 0
    %v969 = vsel %vm674, %v938, 0
    %v972 = vsel %vm674, %v939, 0
    %v975 = vsel %vm674, %v940, 0
    %v978 = vsel %vm674, %v941, 0
    %v981 = vsel %vm674, %v942, 0
    %v984 = vsel %vm674, %v943, 0
    %v987 = vsel %vm674, %v944, 0
    %v990 = vsel %vm674, %v945, 0
    %v993 = vsel %vm674, %v946, 0
    %995 = vmatpush.msra.mxu0 0.0
    %996 = vmatpush.msra.mxu0 0.0
    %997 = vmatpush.msra.mxu0 0.0
    %998 = vmatpush.msra.mxu0 0.0
    %999 = vmatpush.msra.mxu0 0.0
    %1000 = vmatpush.msra.mxu0 0.0
    %1001 = vmatpush.msra.mxu0 0.0
    %1002 = vmatpush.msra.mxu0 0.0
    %1003 = vmatpush.msra.mxu0 0.0
    %1004 = vmatpush.msra.mxu0 0.0
    %1005 = vmatpush.msra.mxu0 0.0
    %1006 = vmatpush.msra.mxu0 0.0
    %1007 = vmatpush.msra.mxu0 0.0
    %1008 = vmatpush.msra.mxu0 0.0
    %1009 = vmatpush.msra.mxu0 0.0
    %1010 = vmatpush.msra.mxu0 %v123
    %1011 = vmatmul.f32.gmra.mxu0 %v948
    %v1012 = vpop.f32.mrf.mxu0
    %v1013 = vadd.f32 0.0, %v1012
    %1014 = vmatmul.f32.gmra.mxu0 %v951
    %v1015 = vpop.f32.mrf.mxu0
    %v1016 = vadd.f32 0.0, %v1015
    %1017 = vmatmul.f32.gmra.mxu0 %v954
    %v1018 = vpop.f32.mrf.mxu0
    %v1019 = vadd.f32 0.0, %v1018
    %1020 = vmatmul.f32.gmra.mxu0 %v957
    %v1021 = vpop.f32.mrf.mxu0
    %v1022 = vadd.f32 0.0, %v1021
    %1023 = vmatmul.f32.gmra.mxu0 %v960
    %v1024 = vpop.f32.mrf.mxu0
    %v1025 = vadd.f32 0.0, %v1024
    %1026 = vmatmul.f32.gmra.mxu0 %v963
    %v1027 = vpop.f32.mrf.mxu0
    %v1028 = vadd.f32 0.0, %v1027
    %1029 = vmatmul.f32.gmra.mxu0 %v966
    %v1030 = vpop.f32.mrf.mxu0
    %v1031 = vadd.f32 0.0, %v1030
    %1032 = vmatmul.f32.gmra.mxu0 %v969
    %v1033 = vpop.f32.mrf.mxu0
    %v1034 = vadd.f32 0.0, %v1033
    %1035 = vmatmul.f32.gmra.mxu0 %v972
    %v1036 = vpop.f32.mrf.mxu0
    %v1037 = vadd.f32 0.0, %v1036
    %1038 = vmatmul.f32.gmra.mxu0 %v975
    %v1039 = vpop.f32.mrf.mxu0
    %v1040 = vadd.f32 0.0, %v1039
    %1041 = vmatmul.f32.gmra.mxu0 %v978
    %v1042 = vpop.f32.mrf.mxu0
    %v1043 = vadd.f32 0.0, %v1042
    %1044 = vmatmul.f32.gmra.mxu0 %v981
    %v1045 = vpop.f32.mrf.mxu0
    %v1046 = vadd.f32 0.0, %v1045
    %1047 = vmatmul.f32.gmra.mxu0 %v984
    %v1048 = vpop.f32.mrf.mxu0
    %v1049 = vadd.f32 0.0, %v1048
    %1050 = vmatmul.f32.gmra.mxu0 %v987
    %v1051 = vpop.f32.mrf.mxu0
    %v1052 = vadd.f32 0.0, %v1051
    %1053 = vmatmul.f32.gmra.mxu0 %v990
    %v1054 = vpop.f32.mrf.mxu0
    %v1055 = vadd.f32 0.0, %v1054
    %1056 = vmatmul.f32.gmra.mxu0 %v993
    %v1057 = vpop.f32.mrf.mxu0
    %v1058 = vadd.f32 0.0, %v1057
    %1059 = vdwg.mxu0
    %1060 = vmatpush.msra.mxu0 0.0
    %1061 = vmatpush.msra.mxu0 0.0
    %1062 = vmatpush.msra.mxu0 0.0
    %1063 = vmatpush.msra.mxu0 0.0
    %1064 = vmatpush.msra.mxu0 0.0
    %1065 = vmatpush.msra.mxu0 0.0
    %1066 = vmatpush.msra.mxu0 0.0
    %1067 = vmatpush.msra.mxu0 0.0
    %1068 = vmatpush.msra.mxu0 0.0
    %1069 = vmatpush.msra.mxu0 0.0
    %1070 = vmatpush.msra.mxu0 0.0
    %1071 = vmatpush.msra.mxu0 0.0
    %1072 = vmatpush.msra.mxu0 0.0
    %1073 = vmatpush.msra.mxu0 0.0
    %1074 = vmatpush.msra.mxu0 0.0
    %1075 = vmatpush.msra.mxu0 %v124
    %1076 = vmatmul.f32.gmra.mxu0 %v948
    %v1077 = vpop.f32.mrf.mxu0
    %v1078 = vadd.f32 0.0, %v1077
    %1079 = vmatmul.f32.gmra.mxu0 %v951
    %v1080 = vpop.f32.mrf.mxu0
    %v1081 = vadd.f32 0.0, %v1080
    %1082 = vmatmul.f32.gmra.mxu0 %v954
    %v1083 = vpop.f32.mrf.mxu0
    %v1084 = vadd.f32 0.0, %v1083
    %1085 = vmatmul.f32.gmra.mxu0 %v957
    %v1086 = vpop.f32.mrf.mxu0
    %v1087 = vadd.f32 0.0, %v1086
    %1088 = vmatmul.f32.gmra.mxu0 %v960
    %v1089 = vpop.f32.mrf.mxu0
    %v1090 = vadd.f32 0.0, %v1089
    %1091 = vmatmul.f32.gmra.mxu0 %v963
    %v1092 = vpop.f32.mrf.mxu0
    %v1093 = vadd.f32 0.0, %v1092
    %1094 = vmatmul.f32.gmra.mxu0 %v966
    %v1095 = vpop.f32.mrf.mxu0
    %v1096 = vadd.f32 0.0, %v1095
    %1097 = vmatmul.f32.gmra.mxu0 %v969
    %v1098 = vpop.f32.mrf.mxu0
    %v1099 = vadd.f32 0.0, %v1098
    %1100 = vmatmul.f32.gmra.mxu0 %v972
    %v1101 = vpop.f32.mrf.mxu0
    %v1102 = vadd.f32 0.0, %v1101
    %1103 = vmatmul.f32.gmra.mxu0 %v975
    %v1104 = vpop.f32.mrf.mxu0
    %v1105 = vadd.f32 0.0, %v1104
    %1106 = vmatmul.f32.gmra.mxu0 %v978
    %v1107 = vpop.f32.mrf.mxu0
    %v1108 = vadd.f32 0.0, %v1107
    %1109 = vmatmul.f32.gmra.mxu0 %v981
    %v1110 = vpop.f32.mrf.mxu0
    %v1111 = vadd.f32 0.0, %v1110
    %1112 = vmatmul.f32.gmra.mxu0 %v984
    %v1113 = vpop.f32.mrf.mxu0
    %v1114 = vadd.f32 0.0, %v1113
    %1115 = vmatmul.f32.gmra.mxu0 %v987
    %v1116 = vpop.f32.mrf.mxu0
    %v1117 = vadd.f32 0.0, %v1116
    %1118 = vmatmul.f32.gmra.mxu0 %v990
    %v1119 = vpop.f32.mrf.mxu0
    %v1120 = vadd.f32 0.0, %v1119
    %1121 = vmatmul.f32.gmra.mxu0 %v993
    %v1122 = vpop.f32.mrf.mxu0
    %v1123 = vadd.f32 0.0, %v1122
    %1124 = vdwg.mxu0
    %v1125 = vadd.f32 %v1013, %v435
    %v1126 = vadd.f32 %v1016, %v438
    %v1127 = vadd.f32 %v1019, %v441
    %v1128 = vadd.f32 %v1022, %v444
    %v1129 = vadd.f32 %v1025, %v447
    %v1130 = vadd.f32 %v1028, %v450
    %v1131 = vadd.f32 %v1031, %v453
    %v1132 = vadd.f32 %v1034, %v456
    %v1133 = vadd.f32 %v1037, %v459
    %v1134 = vadd.f32 %v1040, %v462
    %v1135 = vadd.f32 %v1043, %v465
    %v1136 = vadd.f32 %v1046, %v468
    %v1137 = vadd.f32 %v1049, %v471
    %v1138 = vadd.f32 %v1052, %v474
    %v1139 = vadd.f32 %v1055, %v477
    %v1140 = vadd.f32 %v1058, %v480
    %v1143 = vrot.slane %v175, 1
    %v1144 = vrot.slane %v175, 2
    %v1145 = vrot.slane %v175, 3
    %v1146 = vrot.slane %v175, 4
    %v1147 = vrot.slane %v175, 5
    %v1148 = vrot.slane %v175, 6
    %v1149 = vrot.slane %v175, 7
    %v1150 = vrot.slane %v178, 1
    %v1151 = vrot.slane %v178, 2
    %v1152 = vrot.slane %v178, 3
    %v1153 = vrot.slane %v178, 4
    %v1154 = vrot.slane %v178, 5
    %v1155 = vrot.slane %v178, 6
    %v1156 = vrot.slane %v178, 7
    %v1157 = vperm.slane %v175, 0
    %v1158 = vperm.slane %v1143, 0
    %v1159 = vperm.slane %v1144, 0
    %v1160 = vperm.slane %v1145, 0
    %v1161 = vperm.slane %v1146, 0
    %v1162 = vperm.slane %v1147, 0
    %v1163 = vperm.slane %v1148, 0
    %v1164 = vperm.slane %v1149, 0
    %v1165 = vperm.slane %v178, 0
    %v1166 = vperm.slane %v1150, 0
    %v1167 = vperm.slane %v1151, 0
    %v1168 = vperm.slane %v1152, 0
    %v1169 = vperm.slane %v1153, 0
    %v1170 = vperm.slane %v1154, 0
    %v1171 = vperm.slane %v1155, 0
    %v1172 = vperm.slane %v1156, 0
    %v1189 = vmul.f32 %v1125, %v1157
    %v1190 = vmul.f32 %v1126, %v1158
    %v1191 = vmul.f32 %v1127, %v1159
    %v1192 = vmul.f32 %v1128, %v1160
    %v1193 = vmul.f32 %v1129, %v1161
    %v1194 = vmul.f32 %v1130, %v1162
    %v1195 = vmul.f32 %v1131, %v1163
    %v1196 = vmul.f32 %v1132, %v1164
    %v1197 = vmul.f32 %v1133, %v1165
    %v1198 = vmul.f32 %v1134, %v1166
    %v1199 = vmul.f32 %v1135, %v1167
    %v1200 = vmul.f32 %v1136, %v1168
    %v1201 = vmul.f32 %v1137, %v1169
    %v1202 = vmul.f32 %v1138, %v1170
    %v1203 = vmul.f32 %v1139, %v1171
    %v1204 = vmul.f32 %v1140, %v1172
    %1205 = vadd.xlane.f32.xlu0 %v1189
    %v1206 = vpop.xlane.xlu0 %1205
    %1207 = vadd.xlane.f32.xlu0 %v1190
    %v1208 = vpop.xlane.xlu0 %1207
    %1209 = vadd.xlane.f32.xlu0 %v1191
    %v1210 = vpop.xlane.xlu0 %1209
    %1211 = vadd.xlane.f32.xlu0 %v1192
    %v1212 = vpop.xlane.xlu0 %1211
    %1213 = vadd.xlane.f32.xlu0 %v1193
    %v1214 = vpop.xlane.xlu0 %1213
    %1215 = vadd.xlane.f32.xlu0 %v1194
    %v1216 = vpop.xlane.xlu0 %1215
    %1217 = vadd.xlane.f32.xlu0 %v1195
    %v1218 = vpop.xlane.xlu0 %1217
    %1219 = vadd.xlane.f32.xlu0 %v1196
    %v1220 = vpop.xlane.xlu0 %1219
    %1221 = vadd.xlane.f32.xlu0 %v1197
    %v1222 = vpop.xlane.xlu0 %1221
    %1223 = vadd.xlane.f32.xlu0 %v1198
    %v1224 = vpop.xlane.xlu0 %1223
    %1225 = vadd.xlane.f32.xlu0 %v1199
    %v1226 = vpop.xlane.xlu0 %1225
    %1227 = vadd.xlane.f32.xlu0 %v1200
    %v1228 = vpop.xlane.xlu0 %1227
    %1229 = vadd.xlane.f32.xlu0 %v1201
    %v1230 = vpop.xlane.xlu0 %1229
    %1231 = vadd.xlane.f32.xlu0 %v1202
    %v1232 = vpop.xlane.xlu0 %1231
    %1233 = vadd.xlane.f32.xlu0 %v1203
    %v1234 = vpop.xlane.xlu0 %1233
    %1235 = vadd.xlane.f32.xlu0 %v1204
    %v1236 = vpop.xlane.xlu0 %1235
    %v1237 = vmul.f32 %v1206, 0.17677669
    %v1238 = vmul.f32 %v1208, 0.17677669
    %v1239 = vmul.f32 %v1210, 0.17677669
    %v1240 = vmul.f32 %v1212, 0.17677669
    %v1241 = vmul.f32 %v1214, 0.17677669
    %v1242 = vmul.f32 %v1216, 0.17677669
    %v1243 = vmul.f32 %v1218, 0.17677669
    %v1244 = vmul.f32 %v1220, 0.17677669
    %v1245 = vmul.f32 %v1222, 0.17677669
    %v1246 = vmul.f32 %v1224, 0.17677669
    %v1247 = vmul.f32 %v1226, 0.17677669
    %v1248 = vmul.f32 %v1228, 0.17677669
    %v1249 = vmul.f32 %v1230, 0.17677669
    %v1250 = vmul.f32 %v1232, 0.17677669
    %v1251 = vmul.f32 %v1234, 0.17677669
    %v1252 = vmul.f32 %v1236, 0.17677669
    %vm1253 = vcmp.gt.f32.partialorder %v84, 0.0
    %vm1254 = vcmp.gt.f32.partialorder %v85, 0.0
    %v1271 = vperm.slane %v1237, %v207
    %v1272 = vperm.slane %v1238, %v207
    %v1273 = vperm.slane %v1239, %v207
    %v1274 = vperm.slane %v1240, %v207
    %v1275 = vperm.slane %v1241, %v207
    %v1276 = vperm.slane %v1242, %v207
    %v1277 = vperm.slane %v1243, %v207
    %v1278 = vperm.slane %v1244, %v207
    %v1279 = vperm.slane %v1245, %v207
    %v1280 = vperm.slane %v1246, %v207
    %v1281 = vperm.slane %v1247, %v207
    %v1282 = vperm.slane %v1248, %v207
    %v1283 = vperm.slane %v1249, %v207
    %v1284 = vperm.slane %v1250, %v207
    %v1285 = vperm.slane %v1251, %v207
    %v1286 = vperm.slane %v1252, %v207
    %vm1287 = vcmask 1041409
    %v1288 = vsel %vm1287, %v1272, %v1271
    %vm1289 = vcmask 1042434
    %v1290 = vsel %vm1289, %v1273, %v1288
    %vm1291 = vcmask 1043459
    %v1292 = vsel %vm1291, %v1274, %v1290
    %vm1293 = vcmask 1044484
    %v1294 = vsel %vm1293, %v1275, %v1292
    %vm1295 = vcmask 1045509
    %v1296 = vsel %vm1295, %v1276, %v1294
    %vm1297 = vcmask 1046534
    %v1298 = vsel %vm1297, %v1277, %v1296
    %vm1299 = vcmask 1047559
    %v1300 = vsel %vm1299, %v1278, %v1298
    %v1301 = vsel %vm1287, %v1280, %v1279
    %v1302 = vsel %vm1289, %v1281, %v1301
    %v1303 = vsel %vm1291, %v1282, %v1302
    %v1304 = vsel %vm1293, %v1283, %v1303
    %v1305 = vsel %vm1295, %v1284, %v1304
    %v1306 = vsel %vm1297, %v1285, %v1305
    %v1307 = vsel %vm1299, %v1286, %v1306
    %v1310 = vsel %vm1253, %v1300, -1e+30
    %v1311 = vsel %vm1254, %v1307, -1e+30
    %v1312 = vsel %vm674, %v1310, -inf
    %1313 = vmax.xlane.f32.xlu0 %v1312
    %v1314 = vpop.xlane.xlu0 %1313
    %v1315 = vsel %vm674, %v1311, -inf
    %1316 = vmax.xlane.f32.xlu0 %v1315
    %v1317 = vpop.xlane.xlu0 %1316
    %v1318 = vsub.f32 %v1310, %v1314
    %v1319 = vsub.f32 %v1311, %v1317
    %v1320 = vmul.f32 %v1318, 1.442695
    %v1321 = vpow.pop %v1320
    %v1322 = vmul.f32 %v1319, 1.442695
    %v1323 = vpow.pop %v1322
    %v1324 = vsel %vm674, %v1321, 0.0
    %1325 = vadd.xlane.f32.xlu0 %v1324
    %v1326 = vpop.xlane.xlu0 %1325
    %v1327 = vsel %vm674, %v1323, 0.0
    %1328 = vadd.xlane.f32.xlu0 %v1327
    %v1329 = vpop.xlane.xlu0 %1328
    %v1330 = vrcp.pop %v1326
    %v1331 = vrcp.pop %v1329
    %v1332 = vmul.f32 %v1321, %v1330
    %v1333 = vmul.f32 %v1323, %v1331
    %v1334 = vperm.slane %v1332, 0
    %v1335 = vlaneseq
    %v1336 = vshrl.u32 %v1335, 7
    %1338 = vset.pattern.permute.xlu0 %v1336
    %1339 = vperm.xlu0 %1338, %v1334
    %v1340 = vpop.permute.xlu0 %1339
    %v1341 = vperm.slane %v1332, 1
    %v1342 = vlaneseq
    %v1343 = vshrl.u32 %v1342, 7
    %1345 = vset.pattern.permute.xlu0 %v1343
    %1346 = vperm.xlu0 %1345, %v1341
    %v1347 = vpop.permute.xlu0 %1346
    %v1348 = vperm.slane %v1332, 2
    %v1349 = vlaneseq
    %v1350 = vshrl.u32 %v1349, 7
    %1352 = vset.pattern.permute.xlu0 %v1350
    %1353 = vperm.xlu0 %1352, %v1348
    %v1354 = vpop.permute.xlu0 %1353
    %v1355 = vperm.slane %v1332, 3
    %v1356 = vlaneseq
    %v1357 = vshrl.u32 %v1356, 7
    %1359 = vset.pattern.permute.xlu0 %v1357
    %1360 = vperm.xlu0 %1359, %v1355
    %v1361 = vpop.permute.xlu0 %1360
    %v1362 = vperm.slane %v1332, 4
    %v1363 = vlaneseq
    %v1364 = vshrl.u32 %v1363, 7
    %1366 = vset.pattern.permute.xlu0 %v1364
    %1367 = vperm.xlu0 %1366, %v1362
    %v1368 = vpop.permute.xlu0 %1367
    %v1369 = vperm.slane %v1332, 5
    %v1370 = vlaneseq
    %v1371 = vshrl.u32 %v1370, 7
    %1373 = vset.pattern.permute.xlu0 %v1371
    %1374 = vperm.xlu0 %1373, %v1369
    %v1375 = vpop.permute.xlu0 %1374
    %v1376 = vperm.slane %v1332, 6
    %v1377 = vlaneseq
    %v1378 = vshrl.u32 %v1377, 7
    %1380 = vset.pattern.permute.xlu0 %v1378
    %1381 = vperm.xlu0 %1380, %v1376
    %v1382 = vpop.permute.xlu0 %1381
    %v1383 = vperm.slane %v1332, 7
    %v1384 = vlaneseq
    %v1385 = vshrl.u32 %v1384, 7
    %1387 = vset.pattern.permute.xlu0 %v1385
    %1388 = vperm.xlu0 %1387, %v1383
    %v1389 = vpop.permute.xlu0 %1388
    %v1390 = vperm.slane %v1333, 0
    %v1391 = vlaneseq
    %v1392 = vshrl.u32 %v1391, 7
    %1394 = vset.pattern.permute.xlu0 %v1392
    %1395 = vperm.xlu0 %1394, %v1390
    %v1396 = vpop.permute.xlu0 %1395
    %v1397 = vperm.slane %v1333, 1
    %v1398 = vlaneseq
    %v1399 = vshrl.u32 %v1398, 7
    %1401 = vset.pattern.permute.xlu0 %v1399
    %1402 = vperm.xlu0 %1401, %v1397
    %v1403 = vpop.permute.xlu0 %1402
    %v1404 = vperm.slane %v1333, 2
    %v1405 = vlaneseq
    %v1406 = vshrl.u32 %v1405, 7
    %1408 = vset.pattern.permute.xlu0 %v1406
    %1409 = vperm.xlu0 %1408, %v1404
    %v1410 = vpop.permute.xlu0 %1409
    %v1411 = vperm.slane %v1333, 3
    %v1412 = vlaneseq
    %v1413 = vshrl.u32 %v1412, 7
    %1415 = vset.pattern.permute.xlu0 %v1413
    %1416 = vperm.xlu0 %1415, %v1411
    %v1417 = vpop.permute.xlu0 %1416
    %v1418 = vperm.slane %v1333, 4
    %v1419 = vlaneseq
    %v1420 = vshrl.u32 %v1419, 7
    %1422 = vset.pattern.permute.xlu0 %v1420
    %1423 = vperm.xlu0 %1422, %v1418
    %v1424 = vpop.permute.xlu0 %1423
    %v1425 = vperm.slane %v1333, 5
    %v1426 = vlaneseq
    %v1427 = vshrl.u32 %v1426, 7
    %1429 = vset.pattern.permute.xlu0 %v1427
    %1430 = vperm.xlu0 %1429, %v1425
    %v1431 = vpop.permute.xlu0 %1430
    %v1432 = vperm.slane %v1333, 6
    %v1433 = vlaneseq
    %v1434 = vshrl.u32 %v1433, 7
    %1436 = vset.pattern.permute.xlu0 %v1434
    %1437 = vperm.xlu0 %1436, %v1432
    %v1438 = vpop.permute.xlu0 %1437
    %v1439 = vperm.slane %v1333, 7
    %v1440 = vlaneseq
    %v1441 = vshrl.u32 %v1440, 7
    %1443 = vset.pattern.permute.xlu0 %v1441
    %1444 = vperm.xlu0 %1443, %v1439
    %v1445 = vpop.permute.xlu0 %1444
    %v1446 = vadd.f32 %v435, %v1078
    %v1447 = vadd.f32 %v438, %v1081
    %v1448 = vadd.f32 %v441, %v1084
    %v1449 = vadd.f32 %v444, %v1087
    %v1450 = vadd.f32 %v447, %v1090
    %v1451 = vadd.f32 %v450, %v1093
    %v1452 = vadd.f32 %v453, %v1096
    %v1453 = vadd.f32 %v456, %v1099
    %v1454 = vadd.f32 %v459, %v1102
    %v1455 = vadd.f32 %v462, %v1105
    %v1456 = vadd.f32 %v465, %v1108
    %v1457 = vadd.f32 %v468, %v1111
    %v1458 = vadd.f32 %v471, %v1114
    %v1459 = vadd.f32 %v474, %v1117
    %v1460 = vadd.f32 %v477, %v1120
    %v1461 = vadd.f32 %v480, %v1123
    %v1462 = vmul.f32 %v1340, %v1446
    %v1463 = vmul.f32 %v1347, %v1447
    %v1464 = vmul.f32 %v1354, %v1448
    %v1465 = vmul.f32 %v1361, %v1449
    %v1466 = vmul.f32 %v1368, %v1450
    %v1467 = vmul.f32 %v1375, %v1451
    %v1468 = vmul.f32 %v1382, %v1452
    %v1469 = vmul.f32 %v1389, %v1453
    %v1470 = vmul.f32 %v1396, %v1454
    %v1471 = vmul.f32 %v1403, %v1455
    %v1472 = vmul.f32 %v1410, %v1456
    %v1473 = vmul.f32 %v1417, %v1457
    %v1474 = vmul.f32 %v1424, %v1458
    %v1475 = vmul.f32 %v1431, %v1459
    %v1476 = vmul.f32 %v1438, %v1460
    %v1477 = vmul.f32 %v1445, %v1461
    %v1478 = vrot.slane %v1462, 4
    %v1479 = vadd.f32 %v1462, %v1478
    %v1480 = vrot.slane %v1479, 2
    %v1481 = vadd.f32 %v1479, %v1480
    %v1482 = vrot.slane %v1481, 1
    %v1483 = vadd.f32 %v1481, %v1482
    %v1484 = vrot.slane %v1463, 4
    %v1485 = vadd.f32 %v1463, %v1484
    %v1486 = vrot.slane %v1485, 2
    %v1487 = vadd.f32 %v1485, %v1486
    %v1488 = vrot.slane %v1487, 1
    %v1489 = vadd.f32 %v1487, %v1488
    %v1490 = vrot.slane %v1464, 4
    %v1491 = vadd.f32 %v1464, %v1490
    %v1492 = vrot.slane %v1491, 2
    %v1493 = vadd.f32 %v1491, %v1492
    %v1494 = vrot.slane %v1493, 1
    %v1495 = vadd.f32 %v1493, %v1494
    %v1496 = vrot.slane %v1465, 4
    %v1497 = vadd.f32 %v1465, %v1496
    %v1498 = vrot.slane %v1497, 2
    %v1499 = vadd.f32 %v1497, %v1498
    %v1500 = vrot.slane %v1499, 1
    %v1501 = vadd.f32 %v1499, %v1500
    %v1502 = vrot.slane %v1466, 4
    %v1503 = vadd.f32 %v1466, %v1502
    %v1504 = vrot.slane %v1503, 2
    %v1505 = vadd.f32 %v1503, %v1504
    %v1506 = vrot.slane %v1505, 1
    %v1507 = vadd.f32 %v1505, %v1506
    %v1508 = vrot.slane %v1467, 4
    %v1509 = vadd.f32 %v1467, %v1508
    %v1510 = vrot.slane %v1509, 2
    %v1511 = vadd.f32 %v1509, %v1510
    %v1512 = vrot.slane %v1511, 1
    %v1513 = vadd.f32 %v1511, %v1512
    %v1514 = vrot.slane %v1468, 4
    %v1515 = vadd.f32 %v1468, %v1514
    %v1516 = vrot.slane %v1515, 2
    %v1517 = vadd.f32 %v1515, %v1516
    %v1518 = vrot.slane %v1517, 1
    %v1519 = vadd.f32 %v1517, %v1518
    %v1520 = vrot.slane %v1469, 4
    %v1521 = vadd.f32 %v1469, %v1520
    %v1522 = vrot.slane %v1521, 2
    %v1523 = vadd.f32 %v1521, %v1522
    %v1524 = vrot.slane %v1523, 1
    %v1525 = vadd.f32 %v1523, %v1524
    %v1526 = vrot.slane %v1470, 4
    %v1527 = vadd.f32 %v1470, %v1526
    %v1528 = vrot.slane %v1527, 2
    %v1529 = vadd.f32 %v1527, %v1528
    %v1530 = vrot.slane %v1529, 1
    %v1531 = vadd.f32 %v1529, %v1530
    %v1532 = vrot.slane %v1471, 4
    %v1533 = vadd.f32 %v1471, %v1532
    %v1534 = vrot.slane %v1533, 2
    %v1535 = vadd.f32 %v1533, %v1534
    %v1536 = vrot.slane %v1535, 1
    %v1537 = vadd.f32 %v1535, %v1536
    %v1538 = vrot.slane %v1472, 4
    %v1539 = vadd.f32 %v1472, %v1538
    %v1540 = vrot.slane %v1539, 2
    %v1541 = vadd.f32 %v1539, %v1540
    %v1542 = vrot.slane %v1541, 1
    %v1543 = vadd.f32 %v1541, %v1542
    %v1544 = vrot.slane %v1473, 4
    %v1545 = vadd.f32 %v1473, %v1544
    %v1546 = vrot.slane %v1545, 2
    %v1547 = vadd.f32 %v1545, %v1546
    %v1548 = vrot.slane %v1547, 1
    %v1549 = vadd.f32 %v1547, %v1548
    %v1550 = vrot.slane %v1474, 4
    %v1551 = vadd.f32 %v1474, %v1550
    %v1552 = vrot.slane %v1551, 2
    %v1553 = vadd.f32 %v1551, %v1552
    %v1554 = vrot.slane %v1553, 1
    %v1555 = vadd.f32 %v1553, %v1554
    %v1556 = vrot.slane %v1475, 4
    %v1557 = vadd.f32 %v1475, %v1556
    %v1558 = vrot.slane %v1557, 2
    %v1559 = vadd.f32 %v1557, %v1558
    %v1560 = vrot.slane %v1559, 1
    %v1561 = vadd.f32 %v1559, %v1560
    %v1562 = vrot.slane %v1476, 4
    %v1563 = vadd.f32 %v1476, %v1562
    %v1564 = vrot.slane %v1563, 2
    %v1565 = vadd.f32 %v1563, %v1564
    %v1566 = vrot.slane %v1565, 1
    %v1567 = vadd.f32 %v1565, %v1566
    %v1568 = vrot.slane %v1477, 4
    %v1569 = vadd.f32 %v1477, %v1568
    %v1570 = vrot.slane %v1569, 2
    %v1571 = vadd.f32 %v1569, %v1570
    %v1572 = vrot.slane %v1571, 1
    %v1573 = vadd.f32 %v1571, %v1572
    %v1574 = vsel %vm1253, %v86, -1e+30
    %v1575 = vsel %vm1254, %v87, -1e+30
    %v1576 = vsel %vm674, %v1574, -inf
    %1577 = vmax.xlane.f32.xlu0 %v1576
    %v1578 = vpop.xlane.xlu0 %1577
    %v1579 = vsel %vm674, %v1575, -inf
    %1580 = vmax.xlane.f32.xlu0 %v1579
    %v1581 = vpop.xlane.xlu0 %1580
    %vm1582 = vcmp.eq.f32.partialorder %v1574, %v1578
    %vm1583 = vcmp.eq.f32.partialorder %v1575, %v1581
    %v1584 = vsel %vm1582, %v207, 8
    %v1585 = vsel %vm1583, %v207, 8
    %v1586 = vsel %vm674, %v1584, 2147483647
    %v1587 = vand.u32 %v1586, 65535
    %v1588 = vshra.s32 %v1586, 16
    %v1589 = vcvt.s32.f32 %v1587
    %v1590 = vcvt.s32.f32 %v1588
    %1591 = vmin.xlane.f32.xlu0 %v1590
    %v1592 = vpop.xlane.xlu0 %1591
    %vm1593 = vcmp.eq.f32.partialorder %v1590, %v1592
    %v1594 = vsel %vm1593, %v1589, inf
    %1595 = vmin.xlane.f32.xlu0 %v1594
    %v1596 = vpop.xlane.xlu0 %1595
    %v1597 = vcvt.f32.s32 %v1596
    %v1598 = vcvt.f32.s32 %v1592
    %v1599 = vshll.u32 %v1598, 16
    %v1600 = vadd.s32 %v1599, %v1597
    %v1601 = vsel %vm674, %v1585, 2147483647
    %v1602 = vand.u32 %v1601, 65535
    %v1603 = vshra.s32 %v1601, 16
    %v1604 = vcvt.s32.f32 %v1602
    %v1605 = vcvt.s32.f32 %v1603
    %1606 = vmin.xlane.f32.xlu0 %v1605
    %v1607 = vpop.xlane.xlu0 %1606
    %vm1608 = vcmp.eq.f32.partialorder %v1605, %v1607
    %v1609 = vsel %vm1608, %v1604, inf
    %1610 = vmin.xlane.f32.xlu0 %v1609
    %v1611 = vpop.xlane.xlu0 %1610
    %v1612 = vcvt.f32.s32 %v1611
    %v1613 = vcvt.f32.s32 %v1607
    %v1614 = vshll.u32 %v1613, 16
    %v1615 = vadd.s32 %v1614, %v1612
    %vm1616 = vcmp.eq.s32.totalorder %v207, %v1600
    %vm1617 = vcmp.eq.s32.totalorder %v207, %v1615
    %v1618 = vsel %vm1616, 1, 0
    %v1619 = vsel %vm1617, 1, 0
    %v1620 = vcvt.s32.f32 %v1618
    %v1621 = vcvt.s32.f32 %v1619
    %v1622 = vperm.slane %v1620, 0
    %v1623 = vlaneseq
    %v1624 = vshrl.u32 %v1623, 7
    %1626 = vset.pattern.permute.xlu0 %v1624
    %1627 = vperm.xlu0 %1626, %v1622
    %v1628 = vpop.permute.xlu0 %1627
    %v1629 = vperm.slane %v1620, 1
    %v1630 = vlaneseq
    %v1631 = vshrl.u32 %v1630, 7
    %1633 = vset.pattern.permute.xlu0 %v1631
    %1634 = vperm.xlu0 %1633, %v1629
    %v1635 = vpop.permute.xlu0 %1634
    %v1636 = vperm.slane %v1620, 2
    %v1637 = vlaneseq
    %v1638 = vshrl.u32 %v1637, 7
    %1640 = vset.pattern.permute.xlu0 %v1638
    %1641 = vperm.xlu0 %1640, %v1636
    %v1642 = vpop.permute.xlu0 %1641
    %v1643 = vperm.slane %v1620, 3
    %v1644 = vlaneseq
    %v1645 = vshrl.u32 %v1644, 7
    %1647 = vset.pattern.permute.xlu0 %v1645
    %1648 = vperm.xlu0 %1647, %v1643
    %v1649 = vpop.permute.xlu0 %1648
    %v1650 = vperm.slane %v1620, 4
    %v1651 = vlaneseq
    %v1652 = vshrl.u32 %v1651, 7
    %1654 = vset.pattern.permute.xlu0 %v1652
    %1655 = vperm.xlu0 %1654, %v1650
    %v1656 = vpop.permute.xlu0 %1655
    %v1657 = vperm.slane %v1620, 5
    %v1658 = vlaneseq
    %v1659 = vshrl.u32 %v1658, 7
    %1661 = vset.pattern.permute.xlu0 %v1659
    %1662 = vperm.xlu0 %1661, %v1657
    %v1663 = vpop.permute.xlu0 %1662
    %v1664 = vperm.slane %v1620, 6
    %v1665 = vlaneseq
    %v1666 = vshrl.u32 %v1665, 7
    %1668 = vset.pattern.permute.xlu0 %v1666
    %1669 = vperm.xlu0 %1668, %v1664
    %v1670 = vpop.permute.xlu0 %1669
    %v1671 = vperm.slane %v1620, 7
    %v1672 = vlaneseq
    %v1673 = vshrl.u32 %v1672, 7
    %1675 = vset.pattern.permute.xlu0 %v1673
    %1676 = vperm.xlu0 %1675, %v1671
    %v1677 = vpop.permute.xlu0 %1676
    %v1678 = vperm.slane %v1621, 0
    %v1679 = vlaneseq
    %v1680 = vshrl.u32 %v1679, 7
    %1682 = vset.pattern.permute.xlu0 %v1680
    %1683 = vperm.xlu0 %1682, %v1678
    %v1684 = vpop.permute.xlu0 %1683
    %v1685 = vperm.slane %v1621, 1
    %v1686 = vlaneseq
    %v1687 = vshrl.u32 %v1686, 7
    %1689 = vset.pattern.permute.xlu0 %v1687
    %1690 = vperm.xlu0 %1689, %v1685
    %v1691 = vpop.permute.xlu0 %1690
    %v1692 = vperm.slane %v1621, 2
    %v1693 = vlaneseq
    %v1694 = vshrl.u32 %v1693, 7
    %1696 = vset.pattern.permute.xlu0 %v1694
    %1697 = vperm.xlu0 %1696, %v1692
    %v1698 = vpop.permute.xlu0 %1697
    %v1699 = vperm.slane %v1621, 3
    %v1700 = vlaneseq
    %v1701 = vshrl.u32 %v1700, 7
    %1703 = vset.pattern.permute.xlu0 %v1701
    %1704 = vperm.xlu0 %1703, %v1699
    %v1705 = vpop.permute.xlu0 %1704
    %v1706 = vperm.slane %v1621, 4
    %v1707 = vlaneseq
    %v1708 = vshrl.u32 %v1707, 7
    %1710 = vset.pattern.permute.xlu0 %v1708
    %1711 = vperm.xlu0 %1710, %v1706
    %v1712 = vpop.permute.xlu0 %1711
    %v1713 = vperm.slane %v1621, 5
    %v1714 = vlaneseq
    %v1715 = vshrl.u32 %v1714, 7
    %1717 = vset.pattern.permute.xlu0 %v1715
    %1718 = vperm.xlu0 %1717, %v1713
    %v1719 = vpop.permute.xlu0 %1718
    %v1720 = vperm.slane %v1621, 6
    %v1721 = vlaneseq
    %v1722 = vshrl.u32 %v1721, 7
    %1724 = vset.pattern.permute.xlu0 %v1722
    %1725 = vperm.xlu0 %1724, %v1720
    %v1726 = vpop.permute.xlu0 %1725
    %v1727 = vperm.slane %v1621, 7
    %v1728 = vlaneseq
    %v1729 = vshrl.u32 %v1728, 7
    %1731 = vset.pattern.permute.xlu0 %v1729
    %1732 = vperm.xlu0 %1731, %v1727
    %v1733 = vpop.permute.xlu0 %1732
    %v1734 = vmul.f32 %v1628, %v435
    %v1735 = vmul.f32 %v1635, %v438
    %v1736 = vmul.f32 %v1642, %v441
    %v1737 = vmul.f32 %v1649, %v444
    %v1738 = vmul.f32 %v1656, %v447
    %v1739 = vmul.f32 %v1663, %v450
    %v1740 = vmul.f32 %v1670, %v453
    %v1741 = vmul.f32 %v1677, %v456
    %v1742 = vmul.f32 %v1684, %v459
    %v1743 = vmul.f32 %v1691, %v462
    %v1744 = vmul.f32 %v1698, %v465
    %v1745 = vmul.f32 %v1705, %v468
    %v1746 = vmul.f32 %v1712, %v471
    %v1747 = vmul.f32 %v1719, %v474
    %v1748 = vmul.f32 %v1726, %v477
    %v1749 = vmul.f32 %v1733, %v480
    %v1750 = vrot.slane %v1734, 4
    %v1751 = vadd.f32 %v1734, %v1750
    %v1752 = vrot.slane %v1751, 2
    %v1753 = vadd.f32 %v1751, %v1752
    %v1754 = vrot.slane %v1753, 1
    %v1755 = vadd.f32 %v1753, %v1754
    %v1756 = vrot.slane %v1735, 4
    %v1757 = vadd.f32 %v1735, %v1756
    %v1758 = vrot.slane %v1757, 2
    %v1759 = vadd.f32 %v1757, %v1758
    %v1760 = vrot.slane %v1759, 1
    %v1761 = vadd.f32 %v1759, %v1760
    %v1762 = vrot.slane %v1736, 4
    %v1763 = vadd.f32 %v1736, %v1762
    %v1764 = vrot.slane %v1763, 2
    %v1765 = vadd.f32 %v1763, %v1764
    %v1766 = vrot.slane %v1765, 1
    %v1767 = vadd.f32 %v1765, %v1766
    %v1768 = vrot.slane %v1737, 4
    %v1769 = vadd.f32 %v1737, %v1768
    %v1770 = vrot.slane %v1769, 2
    %v1771 = vadd.f32 %v1769, %v1770
    %v1772 = vrot.slane %v1771, 1
    %v1773 = vadd.f32 %v1771, %v1772
    %v1774 = vrot.slane %v1738, 4
    %v1775 = vadd.f32 %v1738, %v1774
    %v1776 = vrot.slane %v1775, 2
    %v1777 = vadd.f32 %v1775, %v1776
    %v1778 = vrot.slane %v1777, 1
    %v1779 = vadd.f32 %v1777, %v1778
    %v1780 = vrot.slane %v1739, 4
    %v1781 = vadd.f32 %v1739, %v1780
    %v1782 = vrot.slane %v1781, 2
    %v1783 = vadd.f32 %v1781, %v1782
    %v1784 = vrot.slane %v1783, 1
    %v1785 = vadd.f32 %v1783, %v1784
    %v1786 = vrot.slane %v1740, 4
    %v1787 = vadd.f32 %v1740, %v1786
    %v1788 = vrot.slane %v1787, 2
    %v1789 = vadd.f32 %v1787, %v1788
    %v1790 = vrot.slane %v1789, 1
    %v1791 = vadd.f32 %v1789, %v1790
    %v1792 = vrot.slane %v1741, 4
    %v1793 = vadd.f32 %v1741, %v1792
    %v1794 = vrot.slane %v1793, 2
    %v1795 = vadd.f32 %v1793, %v1794
    %v1796 = vrot.slane %v1795, 1
    %v1797 = vadd.f32 %v1795, %v1796
    %v1798 = vrot.slane %v1742, 4
    %v1799 = vadd.f32 %v1742, %v1798
    %v1800 = vrot.slane %v1799, 2
    %v1801 = vadd.f32 %v1799, %v1800
    %v1802 = vrot.slane %v1801, 1
    %v1803 = vadd.f32 %v1801, %v1802
    %v1804 = vrot.slane %v1743, 4
    %v1805 = vadd.f32 %v1743, %v1804
    %v1806 = vrot.slane %v1805, 2
    %v1807 = vadd.f32 %v1805, %v1806
    %v1808 = vrot.slane %v1807, 1
    %v1809 = vadd.f32 %v1807, %v1808
    %v1810 = vrot.slane %v1744, 4
    %v1811 = vadd.f32 %v1744, %v1810
    %v1812 = vrot.slane %v1811, 2
    %v1813 = vadd.f32 %v1811, %v1812
    %v1814 = vrot.slane %v1813, 1
    %v1815 = vadd.f32 %v1813, %v1814
    %v1816 = vrot.slane %v1745, 4
    %v1817 = vadd.f32 %v1745, %v1816
    %v1818 = vrot.slane %v1817, 2
    %v1819 = vadd.f32 %v1817, %v1818
    %v1820 = vrot.slane %v1819, 1
    %v1821 = vadd.f32 %v1819, %v1820
    %v1822 = vrot.slane %v1746, 4
    %v1823 = vadd.f32 %v1746, %v1822
    %v1824 = vrot.slane %v1823, 2
    %v1825 = vadd.f32 %v1823, %v1824
    %v1826 = vrot.slane %v1825, 1
    %v1827 = vadd.f32 %v1825, %v1826
    %v1828 = vrot.slane %v1747, 4
    %v1829 = vadd.f32 %v1747, %v1828
    %v1830 = vrot.slane %v1829, 2
    %v1831 = vadd.f32 %v1829, %v1830
    %v1832 = vrot.slane %v1831, 1
    %v1833 = vadd.f32 %v1831, %v1832
    %v1834 = vrot.slane %v1748, 4
    %v1835 = vadd.f32 %v1748, %v1834
    %v1836 = vrot.slane %v1835, 2
    %v1837 = vadd.f32 %v1835, %v1836
    %v1838 = vrot.slane %v1837, 1
    %v1839 = vadd.f32 %v1837, %v1838
    %v1840 = vrot.slane %v1749, 4
    %v1841 = vadd.f32 %v1749, %v1840
    %v1842 = vrot.slane %v1841, 2
    %v1843 = vadd.f32 %v1841, %v1842
    %v1844 = vrot.slane %v1843, 1
    %v1845 = vadd.f32 %v1843, %v1844
    %v1846 = vmul.f32 %v1755, %v435
    %v1847 = vmul.f32 %v1761, %v438
    %v1848 = vmul.f32 %v1767, %v441
    %v1849 = vmul.f32 %v1773, %v444
    %v1850 = vmul.f32 %v1779, %v447
    %v1851 = vmul.f32 %v1785, %v450
    %v1852 = vmul.f32 %v1791, %v453
    %v1853 = vmul.f32 %v1797, %v456
    %v1854 = vmul.f32 %v1803, %v459
    %v1855 = vmul.f32 %v1809, %v462
    %v1856 = vmul.f32 %v1815, %v465
    %v1857 = vmul.f32 %v1821, %v468
    %v1858 = vmul.f32 %v1827, %v471
    %v1859 = vmul.f32 %v1833, %v474
    %v1860 = vmul.f32 %v1839, %v477
    %v1861 = vmul.f32 %v1845, %v480
    %1862 = vadd.xlane.f32.xlu0 %v1846
    %v1863 = vpop.xlane.xlu0 %1862
    %1864 = vadd.xlane.f32.xlu0 %v1847
    %v1865 = vpop.xlane.xlu0 %1864
    %1866 = vadd.xlane.f32.xlu0 %v1848
    %v1867 = vpop.xlane.xlu0 %1866
    %1868 = vadd.xlane.f32.xlu0 %v1849
    %v1869 = vpop.xlane.xlu0 %1868
    %1870 = vadd.xlane.f32.xlu0 %v1850
    %v1871 = vpop.xlane.xlu0 %1870
    %1872 = vadd.xlane.f32.xlu0 %v1851
    %v1873 = vpop.xlane.xlu0 %1872
    %1874 = vadd.xlane.f32.xlu0 %v1852
    %v1875 = vpop.xlane.xlu0 %1874
    %1876 = vadd.xlane.f32.xlu0 %v1853
    %v1877 = vpop.xlane.xlu0 %1876
    %1878 = vadd.xlane.f32.xlu0 %v1854
    %v1879 = vpop.xlane.xlu0 %1878
    %1880 = vadd.xlane.f32.xlu0 %v1855
    %v1881 = vpop.xlane.xlu0 %1880
    %1882 = vadd.xlane.f32.xlu0 %v1856
    %v1883 = vpop.xlane.xlu0 %1882
    %1884 = vadd.xlane.f32.xlu0 %v1857
    %v1885 = vpop.xlane.xlu0 %1884
    %1886 = vadd.xlane.f32.xlu0 %v1858
    %v1887 = vpop.xlane.xlu0 %1886
    %1888 = vadd.xlane.f32.xlu0 %v1859
    %v1889 = vpop.xlane.xlu0 %1888
    %1890 = vadd.xlane.f32.xlu0 %v1860
    %v1891 = vpop.xlane.xlu0 %1890
    %1892 = vadd.xlane.f32.xlu0 %v1861
    %v1893 = vpop.xlane.xlu0 %1892
    %v1894 = vmul.f32 %v1863, 0.17677669
    %v1895 = vmul.f32 %v1865, 0.17677669
    %v1896 = vmul.f32 %v1867, 0.17677669
    %v1897 = vmul.f32 %v1869, 0.17677669
    %v1898 = vmul.f32 %v1871, 0.17677669
    %v1899 = vmul.f32 %v1873, 0.17677669
    %v1900 = vmul.f32 %v1875, 0.17677669
    %v1901 = vmul.f32 %v1877, 0.17677669
    %v1902 = vmul.f32 %v1879, 0.17677669
    %v1903 = vmul.f32 %v1881, 0.17677669
    %v1904 = vmul.f32 %v1883, 0.17677669
    %v1905 = vmul.f32 %v1885, 0.17677669
    %v1906 = vmul.f32 %v1887, 0.17677669
    %v1907 = vmul.f32 %v1889, 0.17677669
    %v1908 = vmul.f32 %v1891, 0.17677669
    %v1909 = vmul.f32 %v1893, 0.17677669
    %v1926 = vperm.slane %v1894, %v207
    %v1927 = vperm.slane %v1895, %v207
    %v1928 = vperm.slane %v1896, %v207
    %v1929 = vperm.slane %v1897, %v207
    %v1930 = vperm.slane %v1898, %v207
    %v1931 = vperm.slane %v1899, %v207
    %v1932 = vperm.slane %v1900, %v207
    %v1933 = vperm.slane %v1901, %v207
    %v1934 = vperm.slane %v1902, %v207
    %v1935 = vperm.slane %v1903, %v207
    %v1936 = vperm.slane %v1904, %v207
    %v1937 = vperm.slane %v1905, %v207
    %v1938 = vperm.slane %v1906, %v207
    %v1939 = vperm.slane %v1907, %v207
    %v1940 = vperm.slane %v1908, %v207
    %v1941 = vperm.slane %v1909, %v207
    %v1942 = vsel %vm1287, %v1927, %v1926
    %v1943 = vsel %vm1289, %v1928, %v1942
    %v1944 = vsel %vm1291, %v1929, %v1943
    %v1945 = vsel %vm1293, %v1930, %v1944
    %v1946 = vsel %vm1295, %v1931, %v1945
    %v1947 = vsel %vm1297, %v1932, %v1946
    %v1948 = vsel %vm1299, %v1933, %v1947
    %v1949 = vsel %vm1287, %v1935, %v1934
    %v1950 = vsel %vm1289, %v1936, %v1949
    %v1951 = vsel %vm1291, %v1937, %v1950
    %v1952 = vsel %vm1293, %v1938, %v1951
    %v1953 = vsel %vm1295, %v1939, %v1952
    %v1954 = vsel %vm1297, %v1940, %v1953
    %v1955 = vsel %vm1299, %v1941, %v1954
    %v1958 = vsel %vm1253, %v1948, -1e+30
    %v1959 = vsel %vm1254, %v1955, -1e+30
    %v1960 = vsel %vm674, %v1958, -inf
    %1961 = vmax.xlane.f32.xlu0 %v1960
    %v1962 = vpop.xlane.xlu0 %1961
    %v1963 = vsel %vm674, %v1959, -inf
    %1964 = vmax.xlane.f32.xlu0 %v1963
    %v1965 = vpop.xlane.xlu0 %1964
    %v1966 = vsub.f32 %v1958, %v1962
    %v1967 = vsub.f32 %v1959, %v1965
    %v1968 = vmul.f32 %v1966, 1.442695
    %v1969 = vpow.pop %v1968
    %v1970 = vmul.f32 %v1967, 1.442695
    %v1971 = vpow.pop %v1970
    %v1972 = vsel %vm674, %v1969, 0.0
    %1973 = vadd.xlane.f32.xlu0 %v1972
    %v1974 = vpop.xlane.xlu0 %1973
    %v1975 = vsel %vm674, %v1971, 0.0
    %1976 = vadd.xlane.f32.xlu0 %v1975
    %v1977 = vpop.xlane.xlu0 %1976
    %v1978 = vrcp.pop %v1974
    %v1979 = vrcp.pop %v1977
    %v1980 = vmul.f32 %v1969, %v1978
    %v1981 = vmul.f32 %v1971, %v1979
    %v1982 = vperm.slane %v1980, 0
    %v1983 = vlaneseq
    %v1984 = vshrl.u32 %v1983, 7
    %1986 = vset.pattern.permute.xlu0 %v1984
    %1987 = vperm.xlu0 %1986, %v1982
    %v1988 = vpop.permute.xlu0 %1987
    %v1989 = vperm.slane %v1980, 1
    %v1990 = vlaneseq
    %v1991 = vshrl.u32 %v1990, 7
    %1993 = vset.pattern.permute.xlu0 %v1991
    %1994 = vperm.xlu0 %1993, %v1989
    %v1995 = vpop.permute.xlu0 %1994
    %v1996 = vperm.slane %v1980, 2
    %v1997 = vlaneseq
    %v1998 = vshrl.u32 %v1997, 7
    %2000 = vset.pattern.permute.xlu0 %v1998
    %2001 = vperm.xlu0 %2000, %v1996
    %v2002 = vpop.permute.xlu0 %2001
    %v2003 = vperm.slane %v1980, 3
    %v2004 = vlaneseq
    %v2005 = vshrl.u32 %v2004, 7
    %2007 = vset.pattern.permute.xlu0 %v2005
    %2008 = vperm.xlu0 %2007, %v2003
    %v2009 = vpop.permute.xlu0 %2008
    %v2010 = vperm.slane %v1980, 4
    %v2011 = vlaneseq
    %v2012 = vshrl.u32 %v2011, 7
    %2014 = vset.pattern.permute.xlu0 %v2012
    %2015 = vperm.xlu0 %2014, %v2010
    %v2016 = vpop.permute.xlu0 %2015
    %v2017 = vperm.slane %v1980, 5
    %v2018 = vlaneseq
    %v2019 = vshrl.u32 %v2018, 7
    %2021 = vset.pattern.permute.xlu0 %v2019
    %2022 = vperm.xlu0 %2021, %v2017
    %v2023 = vpop.permute.xlu0 %2022
    %v2024 = vperm.slane %v1980, 6
    %v2025 = vlaneseq
    %v2026 = vshrl.u32 %v2025, 7
    %2028 = vset.pattern.permute.xlu0 %v2026
    %2029 = vperm.xlu0 %2028, %v2024
    %v2030 = vpop.permute.xlu0 %2029
    %v2031 = vperm.slane %v1980, 7
    %v2032 = vlaneseq
    %v2033 = vshrl.u32 %v2032, 7
    %2035 = vset.pattern.permute.xlu0 %v2033
    %2036 = vperm.xlu0 %2035, %v2031
    %v2037 = vpop.permute.xlu0 %2036
    %v2038 = vperm.slane %v1981, 0
    %v2039 = vlaneseq
    %v2040 = vshrl.u32 %v2039, 7
    %2042 = vset.pattern.permute.xlu0 %v2040
    %2043 = vperm.xlu0 %2042, %v2038
    %v2044 = vpop.permute.xlu0 %2043
    %v2045 = vperm.slane %v1981, 1
    %v2046 = vlaneseq
    %v2047 = vshrl.u32 %v2046, 7
    %2049 = vset.pattern.permute.xlu0 %v2047
    %2050 = vperm.xlu0 %2049, %v2045
    %v2051 = vpop.permute.xlu0 %2050
    %v2052 = vperm.slane %v1981, 2
    %v2053 = vlaneseq
    %v2054 = vshrl.u32 %v2053, 7
    %2056 = vset.pattern.permute.xlu0 %v2054
    %2057 = vperm.xlu0 %2056, %v2052
    %v2058 = vpop.permute.xlu0 %2057
    %v2059 = vperm.slane %v1981, 3
    %v2060 = vlaneseq
    %v2061 = vshrl.u32 %v2060, 7
    %2063 = vset.pattern.permute.xlu0 %v2061
    %2064 = vperm.xlu0 %2063, %v2059
    %v2065 = vpop.permute.xlu0 %2064
    %v2066 = vperm.slane %v1981, 4
    %v2067 = vlaneseq
    %v2068 = vshrl.u32 %v2067, 7
    %2070 = vset.pattern.permute.xlu0 %v2068
    %2071 = vperm.xlu0 %2070, %v2066
    %v2072 = vpop.permute.xlu0 %2071
    %v2073 = vperm.slane %v1981, 5
    %v2074 = vlaneseq
    %v2075 = vshrl.u32 %v2074, 7
    %2077 = vset.pattern.permute.xlu0 %v2075
    %2078 = vperm.xlu0 %2077, %v2073
    %v2079 = vpop.permute.xlu0 %2078
    %v2080 = vperm.slane %v1981, 6
    %v2081 = vlaneseq
    %v2082 = vshrl.u32 %v2081, 7
    %2084 = vset.pattern.permute.xlu0 %v2082
    %2085 = vperm.xlu0 %2084, %v2080
    %v2086 = vpop.permute.xlu0 %2085
    %v2087 = vperm.slane %v1981, 7
    %v2088 = vlaneseq
    %v2089 = vshrl.u32 %v2088, 7
    %2091 = vset.pattern.permute.xlu0 %v2089
    %2092 = vperm.xlu0 %2091, %v2087
    %v2093 = vpop.permute.xlu0 %2092
    %v2094 = vmul.f32 %v1988, %v435
    %v2095 = vmul.f32 %v1995, %v438
    %v2096 = vmul.f32 %v2002, %v441
    %v2097 = vmul.f32 %v2009, %v444
    %v2098 = vmul.f32 %v2016, %v447
    %v2099 = vmul.f32 %v2023, %v450
    %v2100 = vmul.f32 %v2030, %v453
    %v2101 = vmul.f32 %v2037, %v456
    %v2102 = vmul.f32 %v2044, %v459
    %v2103 = vmul.f32 %v2051, %v462
    %v2104 = vmul.f32 %v2058, %v465
    %v2105 = vmul.f32 %v2065, %v468
    %v2106 = vmul.f32 %v2072, %v471
    %v2107 = vmul.f32 %v2079, %v474
    %v2108 = vmul.f32 %v2086, %v477
    %v2109 = vmul.f32 %v2093, %v480
    %v2110 = vrot.slane %v2094, 4
    %v2111 = vadd.f32 %v2094, %v2110
    %v2112 = vrot.slane %v2111, 2
    %v2113 = vadd.f32 %v2111, %v2112
    %v2114 = vrot.slane %v2113, 1
    %v2115 = vadd.f32 %v2113, %v2114
    %v2116 = vrot.slane %v2095, 4
    %v2117 = vadd.f32 %v2095, %v2116
    %v2118 = vrot.slane %v2117, 2
    %v2119 = vadd.f32 %v2117, %v2118
    %v2120 = vrot.slane %v2119, 1
    %v2121 = vadd.f32 %v2119, %v2120
    %v2122 = vrot.slane %v2096, 4
    %v2123 = vadd.f32 %v2096, %v2122
    %v2124 = vrot.slane %v2123, 2
    %v2125 = vadd.f32 %v2123, %v2124
    %v2126 = vrot.slane %v2125, 1
    %v2127 = vadd.f32 %v2125, %v2126
    %v2128 = vrot.slane %v2097, 4
    %v2129 = vadd.f32 %v2097, %v2128
    %v2130 = vrot.slane %v2129, 2
    %v2131 = vadd.f32 %v2129, %v2130
    %v2132 = vrot.slane %v2131, 1
    %v2133 = vadd.f32 %v2131, %v2132
    %v2134 = vrot.slane %v2098, 4
    %v2135 = vadd.f32 %v2098, %v2134
    %v2136 = vrot.slane %v2135, 2
    %v2137 = vadd.f32 %v2135, %v2136
    %v2138 = vrot.slane %v2137, 1
    %v2139 = vadd.f32 %v2137, %v2138
    %v2140 = vrot.slane %v2099, 4
    %v2141 = vadd.f32 %v2099, %v2140
    %v2142 = vrot.slane %v2141, 2
    %v2143 = vadd.f32 %v2141, %v2142
    %v2144 = vrot.slane %v2143, 1
    %v2145 = vadd.f32 %v2143, %v2144
    %v2146 = vrot.slane %v2100, 4
    %v2147 = vadd.f32 %v2100, %v2146
    %v2148 = vrot.slane %v2147, 2
    %v2149 = vadd.f32 %v2147, %v2148
    %v2150 = vrot.slane %v2149, 1
    %v2151 = vadd.f32 %v2149, %v2150
    %v2152 = vrot.slane %v2101, 4
    %v2153 = vadd.f32 %v2101, %v2152
    %v2154 = vrot.slane %v2153, 2
    %v2155 = vadd.f32 %v2153, %v2154
    %v2156 = vrot.slane %v2155, 1
    %v2157 = vadd.f32 %v2155, %v2156
    %v2158 = vrot.slane %v2102, 4
    %v2159 = vadd.f32 %v2102, %v2158
    %v2160 = vrot.slane %v2159, 2
    %v2161 = vadd.f32 %v2159, %v2160
    %v2162 = vrot.slane %v2161, 1
    %v2163 = vadd.f32 %v2161, %v2162
    %v2164 = vrot.slane %v2103, 4
    %v2165 = vadd.f32 %v2103, %v2164
    %v2166 = vrot.slane %v2165, 2
    %v2167 = vadd.f32 %v2165, %v2166
    %v2168 = vrot.slane %v2167, 1
    %v2169 = vadd.f32 %v2167, %v2168
    %v2170 = vrot.slane %v2104, 4
    %v2171 = vadd.f32 %v2104, %v2170
    %v2172 = vrot.slane %v2171, 2
    %v2173 = vadd.f32 %v2171, %v2172
    %v2174 = vrot.slane %v2173, 1
    %v2175 = vadd.f32 %v2173, %v2174
    %v2176 = vrot.slane %v2105, 4
    %v2177 = vadd.f32 %v2105, %v2176
    %v2178 = vrot.slane %v2177, 2
    %v2179 = vadd.f32 %v2177, %v2178
    %v2180 = vrot.slane %v2179, 1
    %v2181 = vadd.f32 %v2179, %v2180
    %v2182 = vrot.slane %v2106, 4
    %v2183 = vadd.f32 %v2106, %v2182
    %v2184 = vrot.slane %v2183, 2
    %v2185 = vadd.f32 %v2183, %v2184
    %v2186 = vrot.slane %v2185, 1
    %v2187 = vadd.f32 %v2185, %v2186
    %v2188 = vrot.slane %v2107, 4
    %v2189 = vadd.f32 %v2107, %v2188
    %v2190 = vrot.slane %v2189, 2
    %v2191 = vadd.f32 %v2189, %v2190
    %v2192 = vrot.slane %v2191, 1
    %v2193 = vadd.f32 %v2191, %v2192
    %v2194 = vrot.slane %v2108, 4
    %v2195 = vadd.f32 %v2108, %v2194
    %v2196 = vrot.slane %v2195, 2
    %v2197 = vadd.f32 %v2195, %v2196
    %v2198 = vrot.slane %v2197, 1
    %v2199 = vadd.f32 %v2197, %v2198
    %v2200 = vrot.slane %v2109, 4
    %v2201 = vadd.f32 %v2109, %v2200
    %v2202 = vrot.slane %v2201, 2
    %v2203 = vadd.f32 %v2201, %v2202
    %v2204 = vrot.slane %v2203, 1
    %v2205 = vadd.f32 %v2203, %v2204
    %v2222 = vsel %vm1287, %v1489, %v1483
    %v2223 = vsel %vm1289, %v1495, %v2222
    %v2224 = vsel %vm1291, %v1501, %v2223
    %v2225 = vsel %vm1293, %v1507, %v2224
    %v2226 = vsel %vm1295, %v1513, %v2225
    %v2227 = vsel %vm1297, %v1519, %v2226
    %v2228 = vsel %vm1299, %v1525, %v2227
    %v2229 = vsel %vm1287, %v1537, %v1531
    %v2230 = vsel %vm1289, %v1543, %v2229
    %v2231 = vsel %vm1291, %v1549, %v2230
    %v2232 = vsel %vm1293, %v1555, %v2231
    %v2233 = vsel %vm1295, %v1561, %v2232
    %v2234 = vsel %vm1297, %v1567, %v2233
    %v2235 = vsel %vm1299, %v1573, %v2234
    %v2254 = vsel %vm1287, %v2121, %v2115
    %v2255 = vsel %vm1289, %v2127, %v2254
    %v2256 = vsel %vm1291, %v2133, %v2255
    %v2257 = vsel %vm1293, %v2139, %v2256
    %v2258 = vsel %vm1295, %v2145, %v2257
    %v2259 = vsel %vm1297, %v2151, %v2258
    %v2260 = vsel %vm1299, %v2157, %v2259
    %v2261 = vsel %vm1287, %v2169, %v2163
    %v2262 = vsel %vm1289, %v2175, %v2261
    %v2263 = vsel %vm1291, %v2181, %v2262
    %v2264 = vsel %vm1293, %v2187, %v2263
    %v2265 = vsel %vm1295, %v2193, %v2264
    %v2266 = vsel %vm1297, %v2199, %v2265
    %v2267 = vsel %vm1299, %v2205, %v2266
    %2270 = vmatpush.msra.mxu0 %v140
    %2271 = vmatpush.msra.mxu0 %v139
    %2272 = vmatpush.msra.mxu0 %v138
    %2273 = vmatpush.msra.mxu0 %v137
    %2274 = vmatpush.msra.mxu0 %v136
    %2275 = vmatpush.msra.mxu0 %v135
    %2276 = vmatpush.msra.mxu0 %v134
    %2277 = vmatpush.msra.mxu0 %v133
    %2278 = vmatpush.msra.mxu0 %v132
    %2279 = vmatpush.msra.mxu0 %v131
    %2280 = vmatpush.msra.mxu0 %v130
    %2281 = vmatpush.msra.mxu0 %v129
    %2282 = vmatpush.msra.mxu0 %v128
    %2283 = vmatpush.msra.mxu0 %v127
    %2284 = vmatpush.msra.mxu0 %v126
    %2285 = vmatpush.msra.mxu0 %v125
    %2286 = vmatmul.f32.gmra.mxu0 %v2228
    %v2287 = vpop.f32.mrf.mxu0
    %v2288 = vadd.f32 %v80, %v2287
    %2289 = vmatmul.f32.gmra.mxu0 %v2235
    %v2290 = vpop.f32.mrf.mxu0
    %v2291 = vadd.f32 %v81, %v2290
    %2292 = vdwg.mxu0
    %2293 = vmatpush.msra.mxu0 %v156
    %2294 = vmatpush.msra.mxu0 %v155
    %2295 = vmatpush.msra.mxu0 %v154
    %2296 = vmatpush.msra.mxu0 %v153
    %2297 = vmatpush.msra.mxu0 %v152
    %2298 = vmatpush.msra.mxu0 %v151
    %2299 = vmatpush.msra.mxu0 %v150
    %2300 = vmatpush.msra.mxu0 %v149
    %2301 = vmatpush.msra.mxu0 %v148
    %2302 = vmatpush.msra.mxu0 %v147
    %2303 = vmatpush.msra.mxu0 %v146
    %2304 = vmatpush.msra.mxu0 %v145
    %2305 = vmatpush.msra.mxu0 %v144
    %2306 = vmatpush.msra.mxu0 %v143
    %2307 = vmatpush.msra.mxu0 %v142
    %2308 = vmatpush.msra.mxu0 %v141
    %2309 = vmatmul.f32.gmra.mxu0 %v2260
    %v2310 = vpop.f32.mrf.mxu0
    %v2311 = vadd.f32 %v2288, %v2310
    %2312 = vmatmul.f32.gmra.mxu0 %v2267
    %v2313 = vpop.f32.mrf.mxu0
    %v2314 = vadd.f32 %v2291, %v2313
    %2315 = vdwg.mxu0
    %vm2316 = vcmp.gt.f32.partialorder %v2311, 0.0
    %vm2317 = vcmp.gt.f32.partialorder %v2314, 0.0
    %v2318 = vmul.f32 %v2311, 1.442695
    %v2319 = vpow.pop %v2318
    %v2320 = vmul.f32 %v2314, 1.442695
    %v2321 = vpow.pop %v2320
    %v2322 = vsub.f32 %v2319, 1.0
    %v2323 = vsub.f32 %v2321, 1.0
    %v2324 = vsel %vm2316, %v2311, %v2322
    %v2325 = vsel %vm2317, %v2314, %v2323
    %2326 = vst [vmem:[#allocation8] sm:$0xff] %v2324
    %2327 = vst [vmem:[#allocation8 + $0x8] sm:$0xff] %v2325
    // Predicated region
    $region50: #{tpu_custom_call.1} parent=1 // pred_check
      _
    $region51: #{tpu_custom_call.1} parent=1 // pred_check_branch
      %2329 = sbr.rel (0) target = $region53
    $region52: #{tpu_custom_call.1} parent=1 // pred_region
      %2331 = vsyncadd [#allocation4], 0
      %s2332 = sshll.u32 [#allocation8], 4
      %s2333 = int_to_ptr.vmem [resolvable:$true] %s2332
      %s2334 = sshll.u32 %s9, 4
      %s2335 = int_to_ptr.hbm [resolvable:$true] %s2334
      %2340 = dma.vmem_to_hbm [thread:$0]  %s2333, 256, %s2335, [#allocation4], 128, 128, 8
    $region53: #{tpu_custom_call.1} parent=1 // pred_fallthru
      _
    // Predicated region
    $region54: #{tpu_custom_call.1} parent=1 // pred_check
      _
    $region55: #{tpu_custom_call.1} parent=1 // pred_check_branch
      %2342 = sbr.rel (0) target = $region57
    $region56: #{tpu_custom_call.1} parent=1 // pred_region
      %2344 = dma.done [#allocation4], 256
    $region57: #{tpu_custom_call.1} parent=1 // pred_fallthru
      _
    %2345 = vsyncpa [#allocation3], 1
    %2346 = vsyncpa [#allocation6], 1
    %2347 = vsyncpa [#allocation4], 1

</llo_original>
